<compile_context>
chip_gen: v7x
topology: tpu7x:2x2x1
jax: 0.10.0
libtpu: 0.0.40
codegen_flags: <defaults>
</compile_context>

<pallas_src>
import functools

import jax
import jax.numpy as jnp
from jax.experimental import pallas as pl
from jax.experimental.pallas import tpu as pltpu


# -----------------------------------------------------------------------------
# Fused kernel: BN1+ReLU -> 1x1 xconv (BN2 scale folded) -> +shift2, ReLU
#               -> 3x3 xconv (pad=1) as 9 lane-rolled, masked, accumulated taps
#               -> [identity, y] written as two lane-dense slab stores
# -----------------------------------------------------------------------------
def _xdense_unit_kernel(x_ref, s1_ref, b1_ref, w1_ref, b2_ref, w2_ref, mask_ref,
                        out_ref, *, W):
    Cin = x_ref.shape[1]
    HW = x_ref.shape[2]
    inc = w2_ref.shape[1]

    # ---- stage 1: channel-major, lane-dense over HW = H*W --------------------
    xT = x_ref[0]                                             # (Cin, HW)  identity
    h = jnp.maximum(xT * s1_ref[...] + b1_ref[...], 0.0)      # BN1 (eval) + ReLU
    m = jnp.dot(w1_ref[...], h,                               # masked 1x1 conv,
                preferred_element_type=jnp.float32)           # BN2 scale pre-folded
    m = jnp.maximum(m + b2_ref[...], 0.0)                     # BN2 shift + ReLU  (mid, HW)
    # TODO(synk): cast dot operands to bf16 (f32 accumulate) at realistic widths.

    # ---- stage 2: masked 3x3 conv, pad=1, as 9 accumulated lane-rolled taps --
    # For tap (kh, kw): source pixel offset off = (kh-1)*W + (kw-1) on the flat
    # HW lane axis.  roll(m, -off) aligns the source with the output pixel; the
    # precomputed mask zeroes taps whose source falls outside the image.
    y = jnp.zeros((inc, HW), jnp.float32)
    for kh in range(3):
        for kw in range(3):
            t = kh * 3 + kw
            off = (kh - 1) * W + (kw - 1)
            shifted = m if off == 0 else pltpu.roll(m, shift=(-off) % HW, axis=1)
            tap = jnp.dot(w2_ref[t], shifted,                 # (inc, mid)@(mid, HW)
                          preferred_element_type=jnp.float32)  # -> (inc, HW)
            y = y + tap * mask_ref[t:t + 1, :]                # pad=1 boundary mask

    # ---- concat([identity, new_features]) as two lane-dense slab stores ------
    out_ref[0, pl.ds(0, Cin), :] = xT                         # channels [0, Cin)
    out_ref[0, pl.ds(Cin, inc), :] = y                        # channels [Cin, Cout)


# -----------------------------------------------------------------------------
# Boundary masks for the 9 taps of the pad=1 3x3 conv, on the flat HW axis.
# -----------------------------------------------------------------------------
def _tap_masks(H, W):
    """(9, H*W) f32: mask[kh*3+kw, h*W+w] = 1 iff (h+kh-1, w+kw-1) is in-image."""
    hh = jnp.arange(H)[:, None]
    ww = jnp.arange(W)[None, :]
    rows = []
    for kh in range(3):
        for kw in range(3):
            dh, dw = kh - 1, kw - 1
            valid = ((hh + dh >= 0) & (hh + dh < H) &
                     (ww + dw >= 0) & (ww + dw < W))
            rows.append(valid.reshape(-1))
    return jnp.stack(rows, axis=0).astype(jnp.float32)


# -----------------------------------------------------------------------------
# Wrapper: NCHW in -> NCHW out, with only free (contiguous) reshapes outside.
# -----------------------------------------------------------------------------
@jax.jit
def xdense_unit_forward(x_nchw, params):
    """x_nchw: (N, Cin, H, W) float32 -> (N, Cout, H, W) float32."""
    scale1, shift1, w1_eff, shift2, w2_taps = params
    N, Cin, H, W = x_nchw.shape
    HW = H * W
    mid = w1_eff.shape[0]
    inc = w2_taps.shape[1]
    Cout = Cin + inc

    x_flat = x_nchw.reshape(N, Cin, HW)                        # contiguous -> free
    masks = _tap_masks(H, W)                                   # constant-folded by jit

    out_flat = pl.pallas_call(
        functools.partial(_xdense_unit_kernel, W=W),
        out_shape=jax.ShapeDtypeStruct((N, Cout, HW), jnp.float32),
        grid_spec=pltpu.PrefetchScalarGridSpec(
            num_scalar_prefetch=0,
            grid=(N,),
            in_specs=[
                pl.BlockSpec((1, Cin, HW), lambda n: (n, 0, 0)),    # x (channel-major)
                pl.BlockSpec((Cin, 1), lambda n: (0, 0)),           # BN1 scale
                pl.BlockSpec((Cin, 1), lambda n: (0, 0)),           # BN1 shift
                pl.BlockSpec((mid, Cin), lambda n: (0, 0)),         # w1 (scale2 folded)
                pl.BlockSpec((mid, 1), lambda n: (0, 0)),           # BN2 shift
                pl.BlockSpec((9, inc, mid), lambda n: (0, 0, 0)),   # w2 per-tap matrices
                pl.BlockSpec((9, HW), lambda n: (0, 0)),            # boundary masks
            ],
            out_specs=pl.BlockSpec((1, Cout, HW), lambda n: (n, 0, 0)),
        ),
        compiler_params=pltpu.CompilerParams(
            dimension_semantics=("parallel",)),
    )(x_flat, scale1, shift1, w1_eff, shift2, w2_taps, masks)

    return out_flat.reshape(N, Cout, H, W)                     # contiguous -> free


# -----------------------------------------------------------------------------
# Pure-JAX/XLA reference with the same folded params (correctness sanity check).
# -----------------------------------------------------------------------------
def xdense_unit_reference(x_nchw, params):
    scale1, shift1, w1_eff, shift2, w2_taps = params
    N, Cin, H, W = x_nchw.shape
    mid = w1_eff.shape[0]
    inc = w2_taps.shape[1]
    h = jnp.maximum(x_nchw * scale1.reshape(1, Cin, 1, 1)
                    + shift1.reshape(1, Cin, 1, 1), 0.0)
    m = jnp.einsum("oc,nchw->nohw", w1_eff, h)
    m = jnp.maximum(m + shift2.reshape(1, mid, 1, 1), 0.0)
    w2 = jnp.transpose(w2_taps.reshape(3, 3, inc, mid), (2, 3, 0, 1))  # (inc, mid, 3, 3)
    y = jax.lax.conv_general_dilated(
        m, w2, window_strides=(1, 1), padding=((1, 1), (1, 1)),
        dimension_numbers=("NCHW", "OIHW", "NCHW"))
    return jnp.concatenate([x_nchw, y], axis=1)


# -----------------------------------------------------------------------------
# Deterministic parameter construction (mirrors XDenseUnit.__init__ shapes)
# -----------------------------------------------------------------------------
def _make_xconv_mask(key, out_ch, in_ch, expand_ratio):
    """XConv2d mask: per output channel, `in_ch // expand_ratio` inputs kept
    (same channel selection across all kernel taps, as in the torch module)."""
    expand_size = max(in_ch // expand_ratio, 1)
    keys = jax.random.split(key, out_ch)
    mask = jnp.zeros((out_ch, in_ch), jnp.float32)
    for i in range(out_ch):
        idx = jax.random.permutation(keys[i], in_ch)[:expand_size]
        mask = mask.at[i, idx].set(1.0)
    return mask


def _bn_affine(key, c, eps=1e-5):
    k1, k2, k3, k4 = jax.random.split(key, 4)
    gamma = jax.random.uniform(k1, (c,), jnp.float32, 0.5, 1.5)
    beta = 0.1 * jax.random.normal(k2, (c,), jnp.float32)
    r_mean = 0.1 * jax.random.normal(k3, (c,), jnp.float32)
    r_var = jax.random.uniform(k4, (c,), jnp.float32, 0.5, 1.5)
    scale = gamma / jnp.sqrt(r_var + eps)
    shift = beta - r_mean * scale
    return scale, shift


def make_params(key, in_channels, out_channels, expand_ratio):
    bn_size = 4
    inc = out_channels - in_channels
    mid = inc * bn_size

    keys = jax.random.split(key, 6)

    scale1, shift1 = _bn_affine(keys[4], in_channels)          # BN over Cin
    scale2, shift2 = _bn_affine(keys[5], mid)                  # BN over mid

    # conv1: torch weight (mid, Cin, 1, 1), mask applied, no bias;
    # BN2's scale folded into rows -> effective (mid, Cin) matmul weight.
    w1_raw = 0.1 * jax.random.normal(keys[0], (mid, in_channels), jnp.float32)
    m1 = _make_xconv_mask(keys[1], mid, in_channels, expand_ratio)
    w1_eff = (w1_raw * m1) * scale2[:, None]                   # (mid, Cin)

    # conv2: torch weight (inc, mid, 3, 3), mask applied, no bias;
    # laid out as 9 per-tap (inc, mid) matrices: tap index t = kh*3 + kw.
    w2_raw = 0.1 * jax.random.normal(keys[2], (inc, mid, 3, 3), jnp.float32)
    m2 = _make_xconv_mask(keys[3], inc, mid, expand_ratio)[:, :, None, None]
    w2_taps = jnp.transpose(w2_raw * m2, (2, 3, 0, 1)).reshape(9, inc, mid)

    return (scale1.reshape(in_channels, 1), shift1.reshape(in_channels, 1),
            w1_eff, shift2.reshape(mid, 1), w2_taps)


if __name__ == "__main__":
    N, Cin, H, W = 2, 4, 16, 16
    Cout = 8                      # inc = 4, mid = 16
    expand_ratio = 2
    dropout_rate = 0.0            # use_dropout == False -> dropout branch unused

    key = jax.random.PRNGKey(0)
    kx, kp = jax.random.split(key)
    x = jax.random.normal(kx, (N, Cin, H, W), jnp.float32)
    params = make_params(kp, Cin, Cout, expand_ratio)

    out = xdense_unit_forward(x, params)
    jax.block_until_ready(out)
    assert out.shape == (N, Cout, H, W)

    # Sanity check vs. a pure-JAX reference built from the same folded params.
    # Tolerance is loose to absorb MXU f32 pass emulation vs XLA conv precision;
    # a structural bug (wrong tap/roll/mask) would produce O(0.1+) errors.
    ref = xdense_unit_reference(x, params)
    max_err = float(jnp.max(jnp.abs(out - ref)))
    assert max_err < 5e-2, f"kernel mismatch vs reference: max_abs_err={max_err}"

    print("KERNEL_OK")
</pallas_src>

<mosaic_0001>
module attributes {stable_mosaic.version = 11 : i64} {
  func.func @_xdense_unit_kernel(%arg0: i32, %arg1: memref<1x4x256xf32, #tpu.memory_space<vmem>>, %arg2: memref<4x1xf32, #tpu.memory_space<vmem>>, %arg3: memref<4x1xf32, #tpu.memory_space<vmem>>, %arg4: memref<16x4xf32, #tpu.memory_space<vmem>>, %arg5: memref<16x1xf32, #tpu.memory_space<vmem>>, %arg6: memref<9x4x16xf32, #tpu.memory_space<vmem>>, %arg7: memref<9x256xf32, #tpu.memory_space<vmem>>, %arg8: memref<1x8x256xf32, #tpu.memory_space<vmem>>) attributes {dimension_semantics = [#tpu.dimension_semantics<parallel>], iteration_bounds = array<i64: 2>, scalar_prefetch = 0 : i64, scratch_operands = 0 : i64, tpu.core_type = #tpu.core_type<tc>, window_params = [{transform_indices = @transform_0, window_bounds = array<i64: 1, 4, 256>}, {pipeline_mode = #tpu.pipeline_mode<synchronous>, transform_indices = @transform_1, window_bounds = array<i64: 4, 1>}, {pipeline_mode = #tpu.pipeline_mode<synchronous>, transform_indices = @transform_2, window_bounds = array<i64: 4, 1>}, {pipeline_mode = #tpu.pipeline_mode<synchronous>, transform_indices = @transform_3, window_bounds = array<i64: 16, 4>}, {pipeline_mode = #tpu.pipeline_mode<synchronous>, transform_indices = @transform_4, window_bounds = array<i64: 16, 1>}, {pipeline_mode = #tpu.pipeline_mode<synchronous>, transform_indices = @transform_5, window_bounds = array<i64: 9, 4, 16>}, {pipeline_mode = #tpu.pipeline_mode<synchronous>, transform_indices = @transform_6, window_bounds = array<i64: 9, 256>}, {transform_indices = @transform_7, window_bounds = array<i64: 1, 8, 256>}]} {
    %c0 = arith.constant 0 : index
    %c0_0 = arith.constant 0 : index
    %c0_1 = arith.constant 0 : index
    %0 = vector.load %arg1[%c0, %c0_0, %c0_1] : memref<1x4x256xf32, #tpu.memory_space<vmem>>, vector<1x4x256xf32>
    %1 = vector.shape_cast %0 : vector<1x4x256xf32> to vector<4x256xf32>
    %c0_2 = arith.constant 0 : index
    %c0_3 = arith.constant 0 : index
    %2 = vector.load %arg2[%c0_2, %c0_3] : memref<4x1xf32, #tpu.memory_space<vmem>>, vector<4x1xf32>
    %3 = vector.broadcast %2 : vector<4x1xf32> to vector<4x256xf32>
    %4 = arith.mulf %1, %3 : vector<4x256xf32>
    %c0_4 = arith.constant 0 : index
    %c0_5 = arith.constant 0 : index
    %5 = vector.load %arg3[%c0_4, %c0_5] : memref<4x1xf32, #tpu.memory_space<vmem>>, vector<4x1xf32>
    %6 = vector.broadcast %5 : vector<4x1xf32> to vector<4x256xf32>
    %7 = arith.addf %4, %6 : vector<4x256xf32>
    %cst = arith.constant 0.000000e+00 : f32
    %8 = vector.broadcast %cst : f32 to vector<4x256xf32>
    %9 = arith.maximumf %7, %8 : vector<4x256xf32>
    %c0_6 = arith.constant 0 : index
    %c0_7 = arith.constant 0 : index
    %10 = vector.load %arg4[%c0_6, %c0_7] : memref<16x4xf32, #tpu.memory_space<vmem>>, vector<16x4xf32>
    %cst_8 = arith.constant dense<0.000000e+00> : vector<16x256xf32>
    %11 = tpu.matmul %10, %9, %cst_8 {dimension_numbers = #tpu.dot_dimension_numbers<[1], [0], [0], [1], [0, 0, 1, 1], [], []>} : vector<16x4xf32>, vector<4x256xf32>, vector<16x256xf32> -> vector<16x256xf32>
    %c0_9 = arith.constant 0 : index
    %c0_10 = arith.constant 0 : index
    %12 = vector.load %arg5[%c0_9, %c0_10] : memref<16x1xf32, #tpu.memory_space<vmem>>, vector<16x1xf32>
    %13 = vector.broadcast %12 : vector<16x1xf32> to vector<16x256xf32>
    %14 = arith.addf %11, %13 : vector<16x256xf32>
    %cst_11 = arith.constant 0.000000e+00 : f32
    %15 = vector.broadcast %cst_11 : f32 to vector<16x256xf32>
    %16 = arith.maximumf %14, %15 : vector<16x256xf32>
    %cst_12 = arith.constant 0.000000e+00 : f32
    %17 = vector.broadcast %cst_12 : f32 to vector<4x256xf32>
    %c17_i32 = arith.constant 17 : i32
    %18 = tpu.dynamic_rotate %16 by %c17_i32 dim 1 : vector<16x256xf32>, i32 -> vector<16x256xf32>
    %c0_13 = arith.constant 0 : index
    %c0_14 = arith.constant 0 : index
    %c0_15 = arith.constant 0 : index
    %19 = vector.load %arg6[%c0_13, %c0_14, %c0_15] : memref<9x4x16xf32, #tpu.memory_space<vmem>>, vector<1x4x16xf32>
    %20 = vector.shape_cast %19 : vector<1x4x16xf32> to vector<4x16xf32>
    %cst_16 = arith.constant dense<0.000000e+00> : vector<4x256xf32>
    %21 = tpu.matmul %20, %18, %cst_16 {dimension_numbers = #tpu.dot_dimension_numbers<[1], [0], [0], [1], [0, 0, 1, 1], [], []>} : vector<4x16xf32>, vector<16x256xf32>, vector<4x256xf32> -> vector<4x256xf32>
    %c0_17 = arith.constant 0 : index
    %c0_18 = arith.constant 0 : index
    %22 = vector.load %arg7[%c0_17, %c0_18] : memref<9x256xf32, #tpu.memory_space<vmem>>, vector<1x256xf32>
    %23 = vector.broadcast %22 : vector<1x256xf32> to vector<4x256xf32>
    %24 = arith.mulf %21, %23 : vector<4x256xf32>
    %25 = arith.addf %17, %24 : vector<4x256xf32>
    %c16_i32 = arith.constant 16 : i32
    %26 = tpu.dynamic_rotate %16 by %c16_i32 dim 1 : vector<16x256xf32>, i32 -> vector<16x256xf32>
    %c1 = arith.constant 1 : index
    %c0_19 = arith.constant 0 : index
    %c0_20 = arith.constant 0 : index
    %27 = vector.load %arg6[%c1, %c0_19, %c0_20] : memref<9x4x16xf32, #tpu.memory_space<vmem>>, vector<1x4x16xf32>
    %28 = vector.shape_cast %27 : vector<1x4x16xf32> to vector<4x16xf32>
    %cst_21 = arith.constant dense<0.000000e+00> : vector<4x256xf32>
    %29 = tpu.matmul %28, %26, %cst_21 {dimension_numbers = #tpu.dot_dimension_numbers<[1], [0], [0], [1], [0, 0, 1, 1], [], []>} : vector<4x16xf32>, vector<16x256xf32>, vector<4x256xf32> -> vector<4x256xf32>
    %c1_22 = arith.constant 1 : index
    %c0_23 = arith.constant 0 : index
    %30 = vector.load %arg7[%c1_22, %c0_23] : memref<9x256xf32, #tpu.memory_space<vmem>>, vector<1x256xf32>
    %31 = vector.broadcast %30 : vector<1x256xf32> to vector<4x256xf32>
    %32 = arith.mulf %29, %31 : vector<4x256xf32>
    %33 = arith.addf %25, %32 : vector<4x256xf32>
    %c15_i32 = arith.constant 15 : i32
    %34 = tpu.dynamic_rotate %16 by %c15_i32 dim 1 : vector<16x256xf32>, i32 -> vector<16x256xf32>
    %c2 = arith.constant 2 : index
    %c0_24 = arith.constant 0 : index
    %c0_25 = arith.constant 0 : index
    %35 = vector.load %arg6[%c2, %c0_24, %c0_25] : memref<9x4x16xf32, #tpu.memory_space<vmem>>, vector<1x4x16xf32>
    %36 = vector.shape_cast %35 : vector<1x4x16xf32> to vector<4x16xf32>
    %cst_26 = arith.constant dense<0.000000e+00> : vector<4x256xf32>
    %37 = tpu.matmul %36, %34, %cst_26 {dimension_numbers = #tpu.dot_dimension_numbers<[1], [0], [0], [1], [0, 0, 1, 1], [], []>} : vector<4x16xf32>, vector<16x256xf32>, vector<4x256xf32> -> vector<4x256xf32>
    %c2_27 = arith.constant 2 : index
    %c0_28 = arith.constant 0 : index
    %38 = vector.load %arg7[%c2_27, %c0_28] : memref<9x256xf32, #tpu.memory_space<vmem>>, vector<1x256xf32>
    %39 = vector.broadcast %38 : vector<1x256xf32> to vector<4x256xf32>
    %40 = arith.mulf %37, %39 : vector<4x256xf32>
    %41 = arith.addf %33, %40 : vector<4x256xf32>
    %c1_i32 = arith.constant 1 : i32
    %42 = tpu.dynamic_rotate %16 by %c1_i32 dim 1 : vector<16x256xf32>, i32 -> vector<16x256xf32>
    %c3 = arith.constant 3 : index
    %c0_29 = arith.constant 0 : index
    %c0_30 = arith.constant 0 : index
    %43 = vector.load %arg6[%c3, %c0_29, %c0_30] : memref<9x4x16xf32, #tpu.memory_space<vmem>>, vector<1x4x16xf32>
    %44 = vector.shape_cast %43 : vector<1x4x16xf32> to vector<4x16xf32>
    %cst_31 = arith.constant dense<0.000000e+00> : vector<4x256xf32>
    %45 = tpu.matmul %44, %42, %cst_31 {dimension_numbers = #tpu.dot_dimension_numbers<[1], [0], [0], [1], [0, 0, 1, 1], [], []>} : vector<4x16xf32>, vector<16x256xf32>, vector<4x256xf32> -> vector<4x256xf32>
    %c3_32 = arith.constant 3 : index
    %c0_33 = arith.constant 0 : index
    %46 = vector.load %arg7[%c3_32, %c0_33] : memref<9x256xf32, #tpu.memory_space<vmem>>, vector<1x256xf32>
    %47 = vector.broadcast %46 : vector<1x256xf32> to vector<4x256xf32>
    %48 = arith.mulf %45, %47 : vector<4x256xf32>
    %49 = arith.addf %41, %48 : vector<4x256xf32>
    %c4 = arith.constant 4 : index
    %c0_34 = arith.constant 0 : index
    %c0_35 = arith.constant 0 : index
    %50 = vector.load %arg6[%c4, %c0_34, %c0_35] : memref<9x4x16xf32, #tpu.memory_space<vmem>>, vector<1x4x16xf32>
    %51 = vector.shape_cast %50 : vector<1x4x16xf32> to vector<4x16xf32>
    %cst_36 = arith.constant dense<0.000000e+00> : vector<4x256xf32>
    %52 = tpu.matmul %51, %16, %cst_36 {dimension_numbers = #tpu.dot_dimension_numbers<[1], [0], [0], [1], [0, 0, 1, 1], [], []>} : vector<4x16xf32>, vector<16x256xf32>, vector<4x256xf32> -> vector<4x256xf32>
    %c4_37 = arith.constant 4 : index
    %c0_38 = arith.constant 0 : index
    %53 = vector.load %arg7[%c4_37, %c0_38] : memref<9x256xf32, #tpu.memory_space<vmem>>, vector<1x256xf32>
    %54 = vector.broadcast %53 : vector<1x256xf32> to vector<4x256xf32>
    %55 = arith.mulf %52, %54 : vector<4x256xf32>
    %56 = arith.addf %49, %55 : vector<4x256xf32>
    %c255_i32 = arith.constant 255 : i32
    %57 = tpu.dynamic_rotate %16 by %c255_i32 dim 1 : vector<16x256xf32>, i32 -> vector<16x256xf32>
    %c5 = arith.constant 5 : index
    %c0_39 = arith.constant 0 : index
    %c0_40 = arith.constant 0 : index
    %58 = vector.load %arg6[%c5, %c0_39, %c0_40] : memref<9x4x16xf32, #tpu.memory_space<vmem>>, vector<1x4x16xf32>
    %59 = vector.shape_cast %58 : vector<1x4x16xf32> to vector<4x16xf32>
    %cst_41 = arith.constant dense<0.000000e+00> : vector<4x256xf32>
    %60 = tpu.matmul %59, %57, %cst_41 {dimension_numbers = #tpu.dot_dimension_numbers<[1], [0], [0], [1], [0, 0, 1, 1], [], []>} : vector<4x16xf32>, vector<16x256xf32>, vector<4x256xf32> -> vector<4x256xf32>
    %c5_42 = arith.constant 5 : index
    %c0_43 = arith.constant 0 : index
    %61 = vector.load %arg7[%c5_42, %c0_43] : memref<9x256xf32, #tpu.memory_space<vmem>>, vector<1x256xf32>
    %62 = vector.broadcast %61 : vector<1x256xf32> to vector<4x256xf32>
    %63 = arith.mulf %60, %62 : vector<4x256xf32>
    %64 = arith.addf %56, %63 : vector<4x256xf32>
    %c241_i32 = arith.constant 241 : i32
    %65 = tpu.dynamic_rotate %16 by %c241_i32 dim 1 : vector<16x256xf32>, i32 -> vector<16x256xf32>
    %c6 = arith.constant 6 : index
    %c0_44 = arith.constant 0 : index
    %c0_45 = arith.constant 0 : index
    %66 = vector.load %arg6[%c6, %c0_44, %c0_45] : memref<9x4x16xf32, #tpu.memory_space<vmem>>, vector<1x4x16xf32>
    %67 = vector.shape_cast %66 : vector<1x4x16xf32> to vector<4x16xf32>
    %cst_46 = arith.constant dense<0.000000e+00> : vector<4x256xf32>
    %68 = tpu.matmul %67, %65, %cst_46 {dimension_numbers = #tpu.dot_dimension_numbers<[1], [0], [0], [1], [0, 0, 1, 1], [], []>} : vector<4x16xf32>, vector<16x256xf32>, vector<4x256xf32> -> vector<4x256xf32>
    %c6_47 = arith.constant 6 : index
    %c0_48 = arith.constant 0 : index
    %69 = vector.load %arg7[%c6_47, %c0_48] : memref<9x256xf32, #tpu.memory_space<vmem>>, vector<1x256xf32>
    %70 = vector.broadcast %69 : vector<1x256xf32> to vector<4x256xf32>
    %71 = arith.mulf %68, %70 : vector<4x256xf32>
    %72 = arith.addf %64, %71 : vector<4x256xf32>
    %c240_i32 = arith.constant 240 : i32
    %73 = tpu.dynamic_rotate %16 by %c240_i32 dim 1 : vector<16x256xf32>, i32 -> vector<16x256xf32>
    %c7 = arith.constant 7 : index
    %c0_49 = arith.constant 0 : index
    %c0_50 = arith.constant 0 : index
    %74 = vector.load %arg6[%c7, %c0_49, %c0_50] : memref<9x4x16xf32, #tpu.memory_space<vmem>>, vector<1x4x16xf32>
    %75 = vector.shape_cast %74 : vector<1x4x16xf32> to vector<4x16xf32>
    %cst_51 = arith.constant dense<0.000000e+00> : vector<4x256xf32>
    %76 = tpu.matmul %75, %73, %cst_51 {dimension_numbers = #tpu.dot_dimension_numbers<[1], [0], [0], [1], [0, 0, 1, 1], [], []>} : vector<4x16xf32>, vector<16x256xf32>, vector<4x256xf32> -> vector<4x256xf32>
    %c7_52 = arith.constant 7 : index
    %c0_53 = arith.constant 0 : index
    %77 = vector.load %arg7[%c7_52, %c0_53] : memref<9x256xf32, #tpu.memory_space<vmem>>, vector<1x256xf32>
    %78 = vector.broadcast %77 : vector<1x256xf32> to vector<4x256xf32>
    %79 = arith.mulf %76, %78 : vector<4x256xf32>
    %80 = arith.addf %72, %79 : vector<4x256xf32>
    %c239_i32 = arith.constant 239 : i32
    %81 = tpu.dynamic_rotate %16 by %c239_i32 dim 1 : vector<16x256xf32>, i32 -> vector<16x256xf32>
    %c8 = arith.constant 8 : index
    %c0_54 = arith.constant 0 : index
    %c0_55 = arith.constant 0 : index
    %82 = vector.load %arg6[%c8, %c0_54, %c0_55] : memref<9x4x16xf32, #tpu.memory_space<vmem>>, vector<1x4x16xf32>
    %83 = vector.shape_cast %82 : vector<1x4x16xf32> to vector<4x16xf32>
    %cst_56 = arith.constant dense<0.000000e+00> : vector<4x256xf32>
    %84 = tpu.matmul %83, %81, %cst_56 {dimension_numbers = #tpu.dot_dimension_numbers<[1], [0], [0], [1], [0, 0, 1, 1], [], []>} : vector<4x16xf32>, vector<16x256xf32>, vector<4x256xf32> -> vector<4x256xf32>
    %c8_57 = arith.constant 8 : index
    %c0_58 = arith.constant 0 : index
    %85 = vector.load %arg7[%c8_57, %c0_58] : memref<9x256xf32, #tpu.memory_space<vmem>>, vector<1x256xf32>
    %86 = vector.broadcast %85 : vector<1x256xf32> to vector<4x256xf32>
    %87 = arith.mulf %84, %86 : vector<4x256xf32>
    %88 = arith.addf %80, %87 : vector<4x256xf32>
    %c0_59 = arith.constant 0 : index
    %c0_60 = arith.constant 0 : index
    %c0_61 = arith.constant 0 : index
    %89 = vector.load %arg8[%c0_59, %c0_60, %c0_61] : memref<1x8x256xf32, #tpu.memory_space<vmem>>, vector<1x4x256xf32>
    %90 = vector.shape_cast %89 : vector<1x4x256xf32> to vector<4x256xf32>
    %91 = vector.shape_cast %1 : vector<4x256xf32> to vector<1x4x256xf32>
    tpu.vector_store %arg8[%c0_59, %c0_60, %c0_61], %91 {strides = array<i32>} : memref<1x8x256xf32, #tpu.memory_space<vmem>>, vector<1x4x256xf32>,
    %c0_62 = arith.constant 0 : index
    %c4_63 = arith.constant 4 : index
    %c0_64 = arith.constant 0 : index
    %92 = vector.load %arg8[%c0_62, %c4_63, %c0_64] : memref<1x8x256xf32, #tpu.memory_space<vmem>>, vector<1x4x256xf32>
    %93 = vector.shape_cast %92 : vector<1x4x256xf32> to vector<4x256xf32>
    %94 = vector.shape_cast %88 : vector<4x256xf32> to vector<1x4x256xf32>
    tpu.vector_store %arg8[%c0_62, %c4_63, %c0_64], %94 {strides = array<i32>} : memref<1x8x256xf32, #tpu.memory_space<vmem>>, vector<1x4x256xf32>,
    return
  }
  func.func @transform_0(%arg0: i32) -> (i32, i32, i32) {
    %c0_i32 = arith.constant 0 : i32
    %c0_i32_0 = arith.constant 0 : i32
    %c0_i32_1 = arith.constant 0 : i32
    return %arg0, %c0_i32, %c0_i32_0 : i32, i32, i32
  }
  func.func @transform_1(%arg0: i32) -> (i32, i32) {
    %c0_i32 = arith.constant 0 : i32
    %c0_i32_0 = arith.constant 0 : i32
    %c0_i32_1 = arith.constant 0 : i32
    return %c0_i32, %c0_i32_0 : i32, i32
  }
  func.func @transform_2(%arg0: i32) -> (i32, i32) {
    %c0_i32 = arith.constant 0 : i32
    %c0_i32_0 = arith.constant 0 : i32
    %c0_i32_1 = arith.constant 0 : i32
    return %c0_i32, %c0_i32_0 : i32, i32
  }
  func.func @transform_3(%arg0: i32) -> (i32, i32) {
    %c0_i32 = arith.constant 0 : i32
    %c0_i32_0 = arith.constant 0 : i32
    %c0_i32_1 = arith.constant 0 : i32
    return %c0_i32, %c0_i32_0 : i32, i32
  }
  func.func @transform_4(%arg0: i32) -> (i32, i32) {
    %c0_i32 = arith.constant 0 : i32
    %c0_i32_0 = arith.constant 0 : i32
    %c0_i32_1 = arith.constant 0 : i32
    return %c0_i32, %c0_i32_0 : i32, i32
  }
  func.func @transform_5(%arg0: i32) -> (i32, i32, i32) {
    %c0_i32 = arith.constant 0 : i32
    %c0_i32_0 = arith.constant 0 : i32
    %c0_i32_1 = arith.constant 0 : i32
    %c0_i32_2 = arith.constant 0 : i32
    return %c0_i32, %c0_i32_0, %c0_i32_1 : i32, i32, i32
  }
  func.func @transform_6(%arg0: i32) -> (i32, i32) {
    %c0_i32 = arith.constant 0 : i32
    %c0_i32_0 = arith.constant 0 : i32
    %c0_i32_1 = arith.constant 0 : i32
    return %c0_i32, %c0_i32_0 : i32, i32
  }
  func.func @transform_7(%arg0: i32) -> (i32, i32, i32) {
    %c0_i32 = arith.constant 0 : i32
    %c0_i32_0 = arith.constant 0 : i32
    %c0_i32_1 = arith.constant 0 : i32
    return %arg0, %c0_i32, %c0_i32_0 : i32, i32, i32
  }
}

</mosaic_0001>

<llo_original>
// kernel: xdense_unit_forward.1
$region0: #{xdense_unit_forward.1}
  #allocation0 [shape = 'u32[]', space=smem, size = 0x4, offset = 0x4, fixed_abs, tag = 'smem constant byte address 0x4 - core index']
  #allocation1 [shape = 'u32[144,128]{1,0:T(1,128)}', space=vmem, size = 0x12000, scoped, tag = 'internal scratch']
  %s0 = inlined_call_operand.vmem [shape: f32[2,4,256], index: 0, kind: input, shape index: {}]
  %s1 = inlined_call_operand.vmem [shape: f32[4,1], index: 1, kind: input, shape index: {}]
  %s2 = inlined_call_operand.vmem [shape: f32[4,1], index: 2, kind: input, shape index: {}]
  %s3 = inlined_call_operand.vmem [shape: f32[16,4], index: 3, kind: input, shape index: {}]
  %s4 = inlined_call_operand.vmem [shape: f32[16,1], index: 4, kind: input, shape index: {}]
  %s5 = inlined_call_operand.vmem [shape: f32[9,4,16], index: 5, kind: input, shape index: {}]
  %s6 = inlined_call_operand.vmem [shape: f32[9,256], index: 6, kind: input, shape index: {}]
  %s7 = inlined_call_operand.vmem [shape: f32[2,8,256], index: 7, kind: output, shape index: {}]
  %s8 = sld [smem:[#allocation0]]
  $region61: #{xdense_unit_forward.1} parent=0
    _
  %s10 = ssub.s32 1, %s8
  %s11 = scalar_select 0, %s10, %s8
  loop: start=0, step=1, limit=4
  $region2: #{xdense_unit_forward.1} parent=0 // loop_pre_header
    _
  $region3: #{xdense_unit_forward.1} parent=0 // loop_header
    %s13 = sphi 0, %s17
    %p14 = scmp.ge.s32.totalorder %s13, 4
    %s23 = sphi 0, %s25
    %s26 = sphi 0, %s23
    %s27 = sphi 0, %s26
    %s43 = sphi 0, %s27
    %s47 = sphi 0, %s47
    %s49 = sphi 0, %s47
    %s50 = sphi 0, %s49
    %s64 = sphi 0, %s50
    %s68 = sphi 0, %s68
    %s70 = sphi 0, %s68
    %s71 = sphi 0, %s70
    %s85 = sphi 0, %s71
    %s89 = sphi 0, %s89
    %s91 = sphi 0, %s89
    %s92 = sphi 0, %s91
    %s106 = sphi 0, %s92
    %s110 = sphi 0, %s110
    %s112 = sphi 0, %s110
    %s113 = sphi 0, %s112
    %s127 = sphi 0, %s113
    %s131 = sphi 0, %s131
    %s133 = sphi 0, %s131
    %s134 = sphi 0, %s133
    %s148 = sphi 0, %s134
    %s152 = sphi 0, %s152
    %s154 = sphi 0, %s152
    %s155 = sphi 0, %s154
    %s169 = sphi 0, %s155
    %s175 = sphi 0, %s177
    %s178 = sphi 0, %s175
    %s179 = sphi 0, %s178
    %s195 = sphi 0, %s179
  $region4: #{xdense_unit_forward.1} parent=0 // loop_header_branch
    %16 = sbr.rel (%p14) target = $region8
  $region5: #{xdense_unit_forward.1} parent=0 // loop_body
    %s18 = ssub.s32 %s13, 1
    %s19 = ssub.s32 %s13, 2
    %s20 = sadd.s32 %s13, 1
    %s21 = ssub.s32 %s13, %s20
    %p22 = scmp.eq.s32.totalorder %s21, 0
    %s24 = sadd.s32 %s23, 1
    %s25 = scalar_select %p22, %s23, %s24
    %p28 = pneg %p22
    %p29 = scmp.eq.s32.totalorder %s13, 1
    %p30 = por %p28, %p29
    %p31 = scmp.ne.s32.totalorder %s23, %s26
    %p32 = scmp.eq.s32.totalorder %s13, 0
    %p33 = por %p31, %p32
    %p34 = scmp.ne.s32.totalorder %s23, %s26
    %p35 = scmp.eq.s32.totalorder %s18, 1
    %p36 = por %p34, %p35
    %p37 = scmp.ne.s32.totalorder %s26, %s27
    %p38 = scmp.eq.s32.totalorder %s18, 0
    %p39 = por %p37, %p38
    %p40 = scmp.ne.s32.totalorder %s26, %s27
    %p41 = scmp.eq.s32.totalorder %s19, 1
    %p42 = por %p40, %p41
    %p44 = scmp.ne.s32.totalorder %s27, %s43
    %p45 = scmp.eq.s32.totalorder %s19, 0
    %p46 = por %p44, %p45
    %s48 = sadd.s32 %s47, 1
    %p51 = scmp.eq.s32.totalorder %s13, 1
    %p52 = scmp.ne.s32.totalorder %s47, %s49
    %p53 = scmp.eq.s32.totalorder %s13, 0
    %p54 = por %p52, %p53
    %p55 = scmp.ne.s32.totalorder %s47, %s49
    %p56 = scmp.eq.s32.totalorder %s18, 1
    %p57 = por %p55, %p56
    %p58 = scmp.ne.s32.totalorder %s49, %s50
    %p59 = scmp.eq.s32.totalorder %s18, 0
    %p60 = por %p58, %p59
    %p61 = scmp.ne.s32.totalorder %s49, %s50
    %p62 = scmp.eq.s32.totalorder %s19, 1
    %p63 = por %p61, %p62
    %p65 = scmp.ne.s32.totalorder %s50, %s64
    %p66 = scmp.eq.s32.totalorder %s19, 0
    %p67 = por %p65, %p66
    %s69 = sadd.s32 %s68, 1
    %p72 = scmp.eq.s32.totalorder %s13, 1
    %p73 = scmp.ne.s32.totalorder %s68, %s70
    %p74 = scmp.eq.s32.totalorder %s13, 0
    %p75 = por %p73, %p74
    %p76 = scmp.ne.s32.totalorder %s68, %s70
    %p77 = scmp.eq.s32.totalorder %s18, 1
    %p78 = por %p76, %p77
    %p79 = scmp.ne.s32.totalorder %s70, %s71
    %p80 = scmp.eq.s32.totalorder %s18, 0
    %p81 = por %p79, %p80
    %p82 = scmp.ne.s32.totalorder %s70, %s71
    %p83 = scmp.eq.s32.totalorder %s19, 1
    %p84 = por %p82, %p83
    %p86 = scmp.ne.s32.totalorder %s71, %s85
    %p87 = scmp.eq.s32.totalorder %s19, 0
    %p88 = por %p86, %p87
    %s90 = sadd.s32 %s89, 1
    %p93 = scmp.eq.s32.totalorder %s13, 1
    %p94 = scmp.ne.s32.totalorder %s89, %s91
    %p95 = scmp.eq.s32.totalorder %s13, 0
    %p96 = por %p94, %p95
    %p97 = scmp.ne.s32.totalorder %s89, %s91
    %p98 = scmp.eq.s32.totalorder %s18, 1
    %p99 = por %p97, %p98
    %p100 = scmp.ne.s32.totalorder %s91, %s92
    %p101 = scmp.eq.s32.totalorder %s18, 0
    %p102 = por %p100, %p101
    %p103 = scmp.ne.s32.totalorder %s91, %s92
    %p104 = scmp.eq.s32.totalorder %s19, 1
    %p105 = por %p103, %p104
    %p107 = scmp.ne.s32.totalorder %s92, %s106
    %p108 = scmp.eq.s32.totalorder %s19, 0
    %p109 = por %p107, %p108
    %s111 = sadd.s32 %s110, 1
    %p114 = scmp.eq.s32.totalorder %s13, 1
    %p115 = scmp.ne.s32.totalorder %s110, %s112
    %p116 = scmp.eq.s32.totalorder %s13, 0
    %p117 = por %p115, %p116
    %p118 = scmp.ne.s32.totalorder %s110, %s112
    %p119 = scmp.eq.s32.totalorder %s18, 1
    %p120 = por %p118, %p119
    %p121 = scmp.ne.s32.totalorder %s112, %s113
    %p122 = scmp.eq.s32.totalorder %s18, 0
    %p123 = por %p121, %p122
    %p124 = scmp.ne.s32.totalorder %s112, %s113
    %p125 = scmp.eq.s32.totalorder %s19, 1
    %p126 = por %p124, %p125
    %p128 = scmp.ne.s32.totalorder %s113, %s127
    %p129 = scmp.eq.s32.totalorder %s19, 0
    %p130 = por %p128, %p129
    %s132 = sadd.s32 %s131, 1
    %p135 = scmp.eq.s32.totalorder %s13, 1
    %p136 = scmp.ne.s32.totalorder %s131, %s133
    %p137 = scmp.eq.s32.totalorder %s13, 0
    %p138 = por %p136, %p137
    %p139 = scmp.ne.s32.totalorder %s131, %s133
    %p140 = scmp.eq.s32.totalorder %s18, 1
    %p141 = por %p139, %p140
    %p142 = scmp.ne.s32.totalorder %s133, %s134
    %p143 = scmp.eq.s32.totalorder %s18, 0
    %p144 = por %p142, %p143
    %p145 = scmp.ne.s32.totalorder %s133, %s134
    %p146 = scmp.eq.s32.totalorder %s19, 1
    %p147 = por %p145, %p146
    %p149 = scmp.ne.s32.totalorder %s134, %s148
    %p150 = scmp.eq.s32.totalorder %s19, 0
    %p151 = por %p149, %p150
    %s153 = sadd.s32 %s152, 1
    %p156 = scmp.eq.s32.totalorder %s13, 1
    %p157 = scmp.ne.s32.totalorder %s152, %s154
    %p158 = scmp.eq.s32.totalorder %s13, 0
    %p159 = por %p157, %p158
    %p160 = scmp.ne.s32.totalorder %s152, %s154
    %p161 = scmp.eq.s32.totalorder %s18, 1
    %p162 = por %p160, %p161
    %p163 = scmp.ne.s32.totalorder %s154, %s155
    %p164 = scmp.eq.s32.totalorder %s18, 0
    %p165 = por %p163, %p164
    %p166 = scmp.ne.s32.totalorder %s154, %s155
    %p167 = scmp.eq.s32.totalorder %s19, 1
    %p168 = por %p166, %p167
    %p170 = scmp.ne.s32.totalorder %s155, %s169
    %p171 = scmp.eq.s32.totalorder %s19, 0
    %p172 = por %p170, %p171
    %s173 = ssub.s32 %s13, %s20
    %p174 = scmp.eq.s32.totalorder %s173, 0
    %s176 = sadd.s32 %s175, 1
    %s177 = scalar_select %p174, %s175, %s176
    %p180 = pneg %p174
    %p181 = scmp.eq.s32.totalorder %s13, 1
    %p182 = por %p180, %p181
    %p183 = scmp.ne.s32.totalorder %s175, %s178
    %p184 = scmp.eq.s32.totalorder %s13, 0
    %p185 = por %p183, %p184
    %p186 = scmp.ne.s32.totalorder %s175, %s178
    %p187 = scmp.eq.s32.totalorder %s18, 1
    %p188 = por %p186, %p187
    %p189 = scmp.ne.s32.totalorder %s178, %s179
    %p190 = scmp.eq.s32.totalorder %s18, 0
    %p191 = por %p189, %p190
    %p192 = scmp.ne.s32.totalorder %s178, %s179
    %p193 = scmp.eq.s32.totalorder %s19, 1
    %p194 = por %p192, %p193
    %p196 = scmp.ne.s32.totalorder %s179, %s195
    %p197 = scmp.eq.s32.totalorder %s19, 0
    %p198 = por %p196, %p197
    %p199 = scmp.le.s32.totalorder 1, %s13
    %p200 = scmp.lt.s32.totalorder %s13, 3
    %p201 = pnand %p199, %p200
    %p202 = pneg %p201
    // Predicated region
    $region9: #{xdense_unit_forward.1} parent=5 // pred_check
      _
    $region10: #{xdense_unit_forward.1} parent=5 // pred_check_branch
      %204 = sbr.rel (%p201) target = $region12
    $region11: #{xdense_unit_forward.1} parent=5 // pred_region
      %s205 = ssub.s32 %s13, 1
      // Predicated region
      $region13: #{xdense_unit_forward.1} parent=11 // pred_check
        %p206 = pneg %p60
      $region14: #{xdense_unit_forward.1} parent=11 // pred_check_branch
        %208 = sbr.rel (%p206) target = $region16
      $region15: #{xdense_unit_forward.1} parent=11 // pred_region
        _
      $region16: #{xdense_unit_forward.1} parent=11 // pred_fallthru
        _
      // Predicated region
      $region17: #{xdense_unit_forward.1} parent=11 // pred_check
        %p209 = pneg %p81
      $region18: #{xdense_unit_forward.1} parent=11 // pred_check_branch
        %211 = sbr.rel (%p209) target = $region20
      $region19: #{xdense_unit_forward.1} parent=11 // pred_region
        _
      $region20: #{xdense_unit_forward.1} parent=11 // pred_fallthru
        _
      // Predicated region
      $region21: #{xdense_unit_forward.1} parent=11 // pred_check
        %p212 = pneg %p102
      $region22: #{xdense_unit_forward.1} parent=11 // pred_check_branch
        %214 = sbr.rel (%p212) target = $region24
      $region23: #{xdense_unit_forward.1} parent=11 // pred_region
        _
      $region24: #{xdense_unit_forward.1} parent=11 // pred_fallthru
        _
      // Predicated region
      $region25: #{xdense_unit_forward.1} parent=11 // pred_check
        %p215 = pneg %p123
      $region26: #{xdense_unit_forward.1} parent=11 // pred_check_branch
        %217 = sbr.rel (%p215) target = $region28
      $region27: #{xdense_unit_forward.1} parent=11 // pred_region
        _
      $region28: #{xdense_unit_forward.1} parent=11 // pred_fallthru
        _
      // Predicated region
      $region29: #{xdense_unit_forward.1} parent=11 // pred_check
        %p218 = pneg %p144
      $region30: #{xdense_unit_forward.1} parent=11 // pred_check_branch
        %220 = sbr.rel (%p218) target = $region32
      $region31: #{xdense_unit_forward.1} parent=11 // pred_region
        _
      $region32: #{xdense_unit_forward.1} parent=11 // pred_fallthru
        _
      // Predicated region
      $region33: #{xdense_unit_forward.1} parent=11 // pred_check
        %p221 = pneg %p165
      $region34: #{xdense_unit_forward.1} parent=11 // pred_check_branch
        %223 = sbr.rel (%p221) target = $region36
      $region35: #{xdense_unit_forward.1} parent=11 // pred_region
        _
      $region36: #{xdense_unit_forward.1} parent=11 // pred_fallthru
        _
    $region12: #{xdense_unit_forward.1} parent=5 // pred_fallthru
      _
    %p224 = scmp.lt.s32.totalorder %s13, 2
    // Predicated region
    $region37: #{xdense_unit_forward.1} parent=5 // pred_check
      %p225 = pneg %p224
    $region38: #{xdense_unit_forward.1} parent=5 // pred_check_branch
      %227 = sbr.rel (%p225) target = $region40
    $region39: #{xdense_unit_forward.1} parent=5 // pred_region
      // Predicated region
      $region41: #{xdense_unit_forward.1} parent=39 // pred_check
        %p228 = pneg %p33
      $region42: #{xdense_unit_forward.1} parent=39 // pred_check_branch
        %230 = sbr.rel (%p228) target = $region44
      $region43: #{xdense_unit_forward.1} parent=39 // pred_region
        %p231 = scmp.lt.s32.totalorder %s13, 1
        %s232 = scalar_select %p231, %s13, 1
        %s233 = smul.addr %s232, 2
        %s234 = smul.addr %s233, 4
        %s235 = scalar_lea.vmem %s0, %s234
      $region44: #{xdense_unit_forward.1} parent=39 // pred_fallthru
        _
    $region40: #{xdense_unit_forward.1} parent=5 // pred_fallthru
      _
    %p236 = scmp.le.s32.totalorder 1, %s13
    %p237 = scmp.lt.s32.totalorder %s13, 3
    %p238 = pnand %p236, %p237
    %p239 = pneg %p238
    // Predicated region
    $region45: #{xdense_unit_forward.1} parent=5 // pred_check
      _
    $region46: #{xdense_unit_forward.1} parent=5 // pred_check_branch
      %241 = sbr.rel (%p238) target = $region48
    $region47: #{xdense_unit_forward.1} parent=5 // pred_region
      %s242 = ssub.s32 %s13, 1
      %p243 = scmp.lt.s32.totalorder %s18, 1
      %s244 = scalar_select %p243, %s18, 1
      %s245 = smul.addr %s244, 2
      %s246 = smul.addr %s245, 4
      %s247 = scalar_lea.vmem %s0, %s246
      %p248 = pneg %p39
      %p249 = pneg %p36
      %p250 = pneg %p60
      %p251 = pneg %p57
      %p252 = pneg %p81
      %p253 = pneg %p78
      %p254 = pneg %p102
      %p255 = pneg %p99
      %p256 = pneg %p123
      %p257 = pneg %p120
      %p258 = pneg %p144
      %p259 = pneg %p141
      %p260 = pneg %p165
      %p261 = pneg %p162
      %p262 = pneg %p191
      %p263 = pneg %p188
      %p264 = scmp.lt.s32.totalorder %s18, 1
      %s265 = scalar_select %p264, %s18, 1
      %s266 = smul.addr %s265, 2
      %s267 = smul.addr %s266, 8
      %s268 = scalar_lea.vmem %s7, %s267
      %p269 = scmp.lt.s32.totalorder %s18, 1
      %s270 = scalar_select %p269, %s18, 1
      %s271 = smul.addr %s270, 2
      %s272 = smul.addr %s271, 4
      %s273 = scalar_lea.vmem %s0, %s272
      %p274 = scmp.lt.s32.totalorder %s18, 1
      %s275 = scalar_select %p274, %s18, 1
      %s276 = smul.addr %s275, 2
      %s277 = smul.addr %s276, 8
      %s278 = scalar_lea.vmem %s7, %s277
      %v279 = vld [vmem:[%s273] sm:$0xff]
      %v280 = vld [vmem:[%s1] sm:$0xf]
      %282 = vset.pattern.permute.xlu0 0
      %283 = vperm.xlu0 %282, %v280
      %v284 = vpop.permute.xlu0 %283
      %v286 = vunpack.c.l.s4 839922192
      %v287 = vunpack.c.0.s8 %v286
      %v288 = vlaneseq
      %v289 = vshrl.u32 %v288, 7
      %v290 = vsub.s32 %v287, %v289
      %v291 = vrot.slane %v284, %v290
      %v293 = vmul.f32 %v279, %v291
      %v294 = vld [vmem:[%s2] sm:$0xf]
      %296 = vset.pattern.permute.xlu0 0
      %297 = vperm.xlu0 %296, %v294
      %v298 = vpop.permute.xlu0 %297
      %v300 = vunpack.c.l.s4 839922192
      %v301 = vunpack.c.0.s8 %v300
      %v302 = vlaneseq
      %v303 = vshrl.u32 %v302, 7
      %v304 = vsub.s32 %v301, %v303
      %v305 = vrot.slane %v298, %v304
      %v307 = vadd.f32 %v293, %v305
      %v308 = vmax.f32 %v307, 0.0
      %v309 = vld [vmem:[%s3] sm:$0xff]
      %v310 = vld [vmem:[%s3 + $0x8] sm:$0xff]
      %v311 = vld [vmem:[%s4] sm:$0xff]
      %v312 = vld [vmem:[%s4 + $0x8] sm:$0xff]
      %314 = vset.pattern.permute.xlu0 0
      %315 = vperm.xlu0 %314, %v311
      %v316 = vpop.permute.xlu0 %315
      %319 = vset.pattern.permute.xlu0 0
      %320 = vperm.xlu0 %319, %v312
      %v321 = vpop.permute.xlu0 %320
      %v324 = vcombine.high %v308, %v308
      %vm325 = vcmask 31744
      %v327 = vsel %vm325, %v309, 0
      %v330 = vsel %vm325, %v310, 0
      %vm332 = vcmask 1043456
      %v333 = vsel %vm332, %v308, 0
      %v335 = vsel %vm332, %v324, 0
      %337 = vmatprep.subr.mxu0 %v335
      %338 = vmatpush1.msra.mxu0 %v333
      %339 = vmatprep.subr.mxu0 0.0
      %340 = vmatpush1.msra.mxu0 0.0
      %341 = vmatprep.subr.mxu0 0.0
      %342 = vmatpush1.msra.mxu0 0.0
      %343 = vmatprep.subr.mxu0 0.0
      %344 = vmatpush1.msra.mxu0 0.0
      %345 = vmatprep.subr.mxu0 0.0
      %346 = vmatpush1.msra.mxu0 0.0
      %347 = vmatprep.subr.mxu0 0.0
      %348 = vmatpush1.msra.mxu0 0.0
      %349 = vmatprep.subr.mxu0 0.0
      %350 = vmatpush1.msra.mxu0 0.0
      %351 = vmatprep.subr.mxu0 0.0
      %352 = vmatpush1.msra.mxu0 0.0
      %353 = vmatprep.subr.mxu0 0.0
      %354 = vmatpush1.msra.mxu0 0.0
      %355 = vmatprep.subr.mxu0 0.0
      %356 = vmatpush1.msra.mxu0 0.0
      %357 = vmatprep.subr.mxu0 0.0
      %358 = vmatpush1.msra.mxu0 0.0
      %359 = vmatprep.subr.mxu0 0.0
      %360 = vmatpush1.msra.mxu0 0.0
      %361 = vmatprep.subr.mxu0 0.0
      %362 = vmatpush1.msra.mxu0 0.0
      %363 = vmatprep.subr.mxu0 0.0
      %364 = vmatpush1.msra.mxu0 0.0
      %365 = vmatprep.subr.mxu0 0.0
      %366 = vmatpush1.msra.mxu0 0.0
      %367 = vmatprep.subr.mxu0 0.0
      %368 = vmatpush1.msra.mxu0 0.0
      %369 = vmatprep.subr.mxu0 0.0
      %370 = vmatpush1.msra.mxu0 0.0
      %371 = vmatprep.subr.mxu0 0.0
      %372 = vmatpush1.msra.mxu0 0.0
      %373 = vmatprep.subr.mxu0 0.0
      %374 = vmatpush1.msra.mxu0 0.0
      %375 = vmatprep.subr.mxu0 0.0
      %376 = vmatpush1.msra.mxu0 0.0
      %377 = vmatprep.subr.mxu0 0.0
      %378 = vmatpush1.msra.mxu0 0.0
      %379 = vmatprep.subr.mxu0 0.0
      %380 = vmatpush1.msra.mxu0 0.0
      %381 = vmatprep.subr.mxu0 0.0
      %382 = vmatpush1.msra.mxu0 0.0
      %383 = vmatprep.subr.mxu0 0.0
      %384 = vmatpush1.msra.mxu0 0.0
      %385 = vmatprep.subr.mxu0 0.0
      %386 = vmatpush1.msra.mxu0 0.0
      %387 = vmatprep.subr.mxu0 0.0
      %388 = vmatpush1.msra.mxu0 0.0
      %389 = vmatprep.subr.mxu0 0.0
      %390 = vmatpush1.msra.mxu0 0.0
      %391 = vmatprep.subr.mxu0 0.0
      %392 = vmatpush1.msra.mxu0 0.0
      %393 = vmatprep.subr.mxu0 0.0
      %394 = vmatpush1.msra.mxu0 0.0
      %395 = vmatprep.subr.mxu0 0.0
      %396 = vmatpush1.msra.mxu0 0.0
      %397 = vmatprep.subr.mxu0 0.0
      %398 = vmatpush1.msra.mxu0 0.0
      %399 = vmatprep.subr.mxu0 0.0
      %400 = vmatpush1.msra.mxu0 0.0
      %401 = vmatprep.mubr.f32.mxu0 0.0
      %402 = vmatmul.mubr.f32.gmra.mrb[0].mxu0 %v327
      %v403 = vpop.f32.mrb[0].mxu0
      %v404 = vadd.f32 %v316, %v403
      %v405 = vpop.f32.mrb[0].mxu0
      %v406 = vadd.f32 %v316, %v405
      %407 = vmatprep.mubr.f32.mxu0 0.0
      %408 = vmatmul.mubr.f32.gmra.mrb[0].mxu0 %v330
      %v409 = vpop.f32.mrb[0].mxu0
      %v410 = vadd.f32 %v321, %v409
      %v411 = vpop.f32.mrb[0].mxu0
      %v412 = vadd.f32 %v321, %v411
      %413 = vdwg.mxu0
      %v414 = vmax.f32 %v404, 0.0
      %v415 = vmax.f32 %v406, 0.0
      %v416 = vmax.f32 %v410, 0.0
      %v417 = vmax.f32 %v412, 0.0
      %418 = vrot.lane.b32.xlu0 %v414, 17
      %v419 = vpop.permute.xlu0 %418
      %420 = vrot.lane.b32.xlu0 %v416, 17
      %v421 = vpop.permute.xlu0 %420
      %422 = vrot.lane.b32.xlu0 %v415, 17
      %v423 = vpop.permute.xlu0 %422
      %424 = vrot.lane.b32.xlu0 %v417, 17
      %v425 = vpop.permute.xlu0 %424
      %v426 = vlaneseq
      %v427 = vand.u32 %v426, 127
      %vm428 = vcmp.lt.s32.totalorder %v427, 17
      %v429 = vsel %vm428, %v419, %v423
      %v430 = vsel %vm428, %v421, %v425
      %v431 = vsel %vm428, %v423, %v419
      %v432 = vsel %vm428, %v425, %v421
      %v433 = vld [vmem:[%s5] sm:$0xf]
      %vm434 = vcmask 130048
      %v436 = vsel %vm434, %v433, 0
      %438 = vmatprep.subr.mxu0 %v429
      %439 = vmatpush1.msra.mxu0 %v431
      %440 = vmatprep.subr.mxu0 %v430
      %441 = vmatpush1.msra.mxu0 %v432
      %442 = vmatprep.subr.mxu0 0.0
      %443 = vmatpush1.msra.mxu0 0.0
      %444 = vmatprep.subr.mxu0 0.0
      %445 = vmatpush1.msra.mxu0 0.0
      %446 = vmatprep.subr.mxu0 0.0
      %447 = vmatpush1.msra.mxu0 0.0
      %448 = vmatprep.subr.mxu0 0.0
      %449 = vmatpush1.msra.mxu0 0.0
      %450 = vmatprep.subr.mxu0 0.0
      %451 = vmatpush1.msra.mxu0 0.0
      %452 = vmatprep.subr.mxu0 0.0
      %453 = vmatpush1.msra.mxu0 0.0
      %454 = vmatprep.subr.mxu0 0.0
      %455 = vmatpush1.msra.mxu0 0.0
      %456 = vmatprep.subr.mxu0 0.0
      %457 = vmatpush1.msra.mxu0 0.0
      %458 = vmatprep.subr.mxu0 0.0
      %459 = vmatpush1.msra.mxu0 0.0
      %460 = vmatprep.subr.mxu0 0.0
      %461 = vmatpush1.msra.mxu0 0.0
      %462 = vmatprep.subr.mxu0 0.0
      %463 = vmatpush1.msra.mxu0 0.0
      %464 = vmatprep.subr.mxu0 0.0
      %465 = vmatpush1.msra.mxu0 0.0
      %466 = vmatprep.subr.mxu0 0.0
      %467 = vmatpush1.msra.mxu0 0.0
      %468 = vmatprep.subr.mxu0 0.0
      %469 = vmatpush1.msra.mxu0 0.0
      %470 = vmatprep.subr.mxu0 0.0
      %471 = vmatpush1.msra.mxu0 0.0
      %472 = vmatprep.subr.mxu0 0.0
      %473 = vmatpush1.msra.mxu0 0.0
      %474 = vmatprep.subr.mxu0 0.0
      %475 = vmatpush1.msra.mxu0 0.0
      %476 = vmatprep.subr.mxu0 0.0
      %477 = vmatpush1.msra.mxu0 0.0
      %478 = vmatprep.subr.mxu0 0.0
      %479 = vmatpush1.msra.mxu0 0.0
      %480 = vmatprep.subr.mxu0 0.0
      %481 = vmatpush1.msra.mxu0 0.0
      %482 = vmatprep.subr.mxu0 0.0
      %483 = vmatpush1.msra.mxu0 0.0
      %484 = vmatprep.subr.mxu0 0.0
      %485 = vmatpush1.msra.mxu0 0.0
      %486 = vmatprep.subr.mxu0 0.0
      %487 = vmatpush1.msra.mxu0 0.0
      %488 = vmatprep.subr.mxu0 0.0
      %489 = vmatpush1.msra.mxu0 0.0
      %490 = vmatprep.subr.mxu0 0.0
      %491 = vmatpush1.msra.mxu0 0.0
      %492 = vmatprep.subr.mxu0 0.0
      %493 = vmatpush1.msra.mxu0 0.0
      %494 = vmatprep.subr.mxu0 0.0
      %495 = vmatpush1.msra.mxu0 0.0
      %496 = vmatprep.subr.mxu0 0.0
      %497 = vmatpush1.msra.mxu0 0.0
      %498 = vmatprep.subr.mxu0 0.0
      %499 = vmatpush1.msra.mxu0 0.0
      %500 = vmatprep.subr.mxu0 0.0
      %501 = vmatpush1.msra.mxu0 0.0
      %502 = vmatprep.mubr.f32.mxu0 0.0
      %503 = vmatmul.mubr.f32.gmra.mrb[0].mxu0 %v436
      %v504 = vpop.f32.mrb[0].mxu0
      %v505 = vadd.f32 0.0, %v504
      %v506 = vpop.f32.mrb[0].mxu0
      %v507 = vadd.f32 0.0, %v506
      %508 = vdwg.mxu0
      %v509 = vld [vmem:[%s6] ss:$8 sm:$0x3]
      %v511 = vlaneseq
      %v512 = vshrl.u32 %v511, 7
      %v513 = vsub.s32 0, %v512
      %v514 = vrot.slane %v509, %v513
      %v515 = vlaneseq
      %v516 = vshrl.u32 %v515, 7
      %v517 = vsub.s32 1, %v516
      %v518 = vrot.slane %v509, %v517
      %v521 = vmul.f32 %v505, %v514
      %v522 = vmul.f32 %v507, %v518
      %v523 = vadd.f32 %v521, 0.0
      %v524 = vadd.f32 %v522, 0.0
      %525 = vrot.lane.b32.xlu0 %v414, 16
      %v526 = vpop.permute.xlu0 %525
      %527 = vrot.lane.b32.xlu0 %v416, 16
      %v528 = vpop.permute.xlu0 %527
      %529 = vrot.lane.b32.xlu0 %v415, 16
      %v530 = vpop.permute.xlu0 %529
      %531 = vrot.lane.b32.xlu0 %v417, 16
      %v532 = vpop.permute.xlu0 %531
      %vm533 = vcmp.lt.s32.totalorder %v427, 16
      %v534 = vsel %vm533, %v526, %v530
      %v535 = vsel %vm533, %v528, %v532
      %v536 = vsel %vm533, %v530, %v526
      %v537 = vsel %vm533, %v532, %v528
      %s538 = scalar_lea.vmem %s5, 4
      %v539 = vld [vmem:[%s538] sm:$0xf]
      %v541 = vsel %vm434, %v539, 0
      %543 = vmatprep.subr.mxu0 %v534
      %544 = vmatpush1.msra.mxu0 %v536
      %545 = vmatprep.subr.mxu0 %v535
      %546 = vmatpush1.msra.mxu0 %v537
      %547 = vmatprep.subr.mxu0 0.0
      %548 = vmatpush1.msra.mxu0 0.0
      %549 = vmatprep.subr.mxu0 0.0
      %550 = vmatpush1.msra.mxu0 0.0
      %551 = vmatprep.subr.mxu0 0.0
      %552 = vmatpush1.msra.mxu0 0.0
      %553 = vmatprep.subr.mxu0 0.0
      %554 = vmatpush1.msra.mxu0 0.0
      %555 = vmatprep.subr.mxu0 0.0
      %556 = vmatpush1.msra.mxu0 0.0
      %557 = vmatprep.subr.mxu0 0.0
      %558 = vmatpush1.msra.mxu0 0.0
      %559 = vmatprep.subr.mxu0 0.0
      %560 = vmatpush1.msra.mxu0 0.0
      %561 = vmatprep.subr.mxu0 0.0
      %562 = vmatpush1.msra.mxu0 0.0
      %563 = vmatprep.subr.mxu0 0.0
      %564 = vmatpush1.msra.mxu0 0.0
      %565 = vmatprep.subr.mxu0 0.0
      %566 = vmatpush1.msra.mxu0 0.0
      %567 = vmatprep.subr.mxu0 0.0
      %568 = vmatpush1.msra.mxu0 0.0
      %569 = vmatprep.subr.mxu0 0.0
      %570 = vmatpush1.msra.mxu0 0.0
      %571 = vmatprep.subr.mxu0 0.0
      %572 = vmatpush1.msra.mxu0 0.0
      %573 = vmatprep.subr.mxu0 0.0
      %574 = vmatpush1.msra.mxu0 0.0
      %575 = vmatprep.subr.mxu0 0.0
      %576 = vmatpush1.msra.mxu0 0.0
      %577 = vmatprep.subr.mxu0 0.0
      %578 = vmatpush1.msra.mxu0 0.0
      %579 = vmatprep.subr.mxu0 0.0
      %580 = vmatpush1.msra.mxu0 0.0
      %581 = vmatprep.subr.mxu0 0.0
      %582 = vmatpush1.msra.mxu0 0.0
      %583 = vmatprep.subr.mxu0 0.0
      %584 = vmatpush1.msra.mxu0 0.0
      %585 = vmatprep.subr.mxu0 0.0
      %586 = vmatpush1.msra.mxu0 0.0
      %587 = vmatprep.subr.mxu0 0.0
      %588 = vmatpush1.msra.mxu0 0.0
      %589 = vmatprep.subr.mxu0 0.0
      %590 = vmatpush1.msra.mxu0 0.0
      %591 = vmatprep.subr.mxu0 0.0
      %592 = vmatpush1.msra.mxu0 0.0
      %593 = vmatprep.subr.mxu0 0.0
      %594 = vmatpush1.msra.mxu0 0.0
      %595 = vmatprep.subr.mxu0 0.0
      %596 = vmatpush1.msra.mxu0 0.0
      %597 = vmatprep.subr.mxu0 0.0
      %598 = vmatpush1.msra.mxu0 0.0
      %599 = vmatprep.subr.mxu0 0.0
      %600 = vmatpush1.msra.mxu0 0.0
      %601 = vmatprep.subr.mxu0 0.0
      %602 = vmatpush1.msra.mxu0 0.0
      %603 = vmatprep.subr.mxu0 0.0
      %604 = vmatpush1.msra.mxu0 0.0
      %605 = vmatprep.subr.mxu0 0.0
      %606 = vmatpush1.msra.mxu0 0.0
      %607 = vmatprep.mubr.f32.mxu0 0.0
      %608 = vmatmul.mubr.f32.gmra.mrb[0].mxu0 %v541
      %v609 = vpop.f32.mrb[0].mxu0
      %v610 = vadd.f32 0.0, %v609
      %v611 = vpop.f32.mrb[0].mxu0
      %v612 = vadd.f32 0.0, %v611
      %613 = vdwg.mxu0
      %s614 = scalar_lea.vmem %s6, 1
      %v615 = vld [vmem:[%s614] ss:$8 sm:$0x3]
      %v617 = vlaneseq
      %v618 = vshrl.u32 %v617, 7
      %v619 = vsub.s32 0, %v618
      %v620 = vrot.slane %v615, %v619
      %v621 = vlaneseq
      %v622 = vshrl.u32 %v621, 7
      %v623 = vsub.s32 1, %v622
      %v624 = vrot.slane %v615, %v623
      %v627 = vmul.f32 %v610, %v620
      %v628 = vmul.f32 %v612, %v624
      %v629 = vadd.f32 %v523, %v627
      %v630 = vadd.f32 %v524, %v628
      %631 = vrot.lane.b32.xlu0 %v414, 15
      %v632 = vpop.permute.xlu0 %631
      %633 = vrot.lane.b32.xlu0 %v416, 15
      %v634 = vpop.permute.xlu0 %633
      %635 = vrot.lane.b32.xlu0 %v415, 15
      %v636 = vpop.permute.xlu0 %635
      %637 = vrot.lane.b32.xlu0 %v417, 15
      %v638 = vpop.permute.xlu0 %637
      %vm639 = vcmp.lt.s32.totalorder %v427, 15
      %v640 = vsel %vm639, %v632, %v636
      %v641 = vsel %vm639, %v634, %v638
      %v642 = vsel %vm639, %v636, %v632
      %v643 = vsel %vm639, %v638, %v634
      %s644 = scalar_lea.vmem %s5, 8
      %v645 = vld [vmem:[%s644] sm:$0xf]
      %v647 = vsel %vm434, %v645, 0
      %649 = vmatprep.subr.mxu0 %v640
      %650 = vmatpush1.msra.mxu0 %v642
      %651 = vmatprep.subr.mxu0 %v641
      %652 = vmatpush1.msra.mxu0 %v643
      %653 = vmatprep.subr.mxu0 0.0
      %654 = vmatpush1.msra.mxu0 0.0
      %655 = vmatprep.subr.mxu0 0.0
      %656 = vmatpush1.msra.mxu0 0.0
      %657 = vmatprep.subr.mxu0 0.0
      %658 = vmatpush1.msra.mxu0 0.0
      %659 = vmatprep.subr.mxu0 0.0
      %660 = vmatpush1.msra.mxu0 0.0
      %661 = vmatprep.subr.mxu0 0.0
      %662 = vmatpush1.msra.mxu0 0.0
      %663 = vmatprep.subr.mxu0 0.0
      %664 = vmatpush1.msra.mxu0 0.0
      %665 = vmatprep.subr.mxu0 0.0
      %666 = vmatpush1.msra.mxu0 0.0
      %667 = vmatprep.subr.mxu0 0.0
      %668 = vmatpush1.msra.mxu0 0.0
      %669 = vmatprep.subr.mxu0 0.0
      %670 = vmatpush1.msra.mxu0 0.0
      %671 = vmatprep.subr.mxu0 0.0
      %672 = vmatpush1.msra.mxu0 0.0
      %673 = vmatprep.subr.mxu0 0.0
      %674 = vmatpush1.msra.mxu0 0.0
      %675 = vmatprep.subr.mxu0 0.0
      %676 = vmatpush1.msra.mxu0 0.0
      %677 = vmatprep.subr.mxu0 0.0
      %678 = vmatpush1.msra.mxu0 0.0
      %679 = vmatprep.subr.mxu0 0.0
      %680 = vmatpush1.msra.mxu0 0.0
      %681 = vmatprep.subr.mxu0 0.0
      %682 = vmatpush1.msra.mxu0 0.0
      %683 = vmatprep.subr.mxu0 0.0
      %684 = vmatpush1.msra.mxu0 0.0
      %685 = vmatprep.subr.mxu0 0.0
      %686 = vmatpush1.msra.mxu0 0.0
      %687 = vmatprep.subr.mxu0 0.0
      %688 = vmatpush1.msra.mxu0 0.0
      %689 = vmatprep.subr.mxu0 0.0
      %690 = vmatpush1.msra.mxu0 0.0
      %691 = vmatprep.subr.mxu0 0.0
      %692 = vmatpush1.msra.mxu0 0.0
      %693 = vmatprep.subr.mxu0 0.0
      %694 = vmatpush1.msra.mxu0 0.0
      %695 = vmatprep.subr.mxu0 0.0
      %696 = vmatpush1.msra.mxu0 0.0
      %697 = vmatprep.subr.mxu0 0.0
      %698 = vmatpush1.msra.mxu0 0.0
      %699 = vmatprep.subr.mxu0 0.0
      %700 = vmatpush1.msra.mxu0 0.0
      %701 = vmatprep.subr.mxu0 0.0
      %702 = vmatpush1.msra.mxu0 0.0
      %703 = vmatprep.subr.mxu0 0.0
      %704 = vmatpush1.msra.mxu0 0.0
      %705 = vmatprep.subr.mxu0 0.0
      %706 = vmatpush1.msra.mxu0 0.0
      %707 = vmatprep.subr.mxu0 0.0
      %708 = vmatpush1.msra.mxu0 0.0
      %709 = vmatprep.subr.mxu0 0.0
      %710 = vmatpush1.msra.mxu0 0.0
      %711 = vmatprep.subr.mxu0 0.0
      %712 = vmatpush1.msra.mxu0 0.0
      %713 = vmatprep.mubr.f32.mxu0 0.0
      %714 = vmatmul.mubr.f32.gmra.mrb[0].mxu0 %v647
      %v715 = vpop.f32.mrb[0].mxu0
      %v716 = vadd.f32 0.0, %v715
      %v717 = vpop.f32.mrb[0].mxu0
      %v718 = vadd.f32 0.0, %v717
      %719 = vdwg.mxu0
      %s720 = scalar_lea.vmem %s6, 2
      %v721 = vld [vmem:[%s720] ss:$8 sm:$0x3]
      %v723 = vlaneseq
      %v724 = vshrl.u32 %v723, 7
      %v725 = vsub.s32 0, %v724
      %v726 = vrot.slane %v721, %v725
      %v727 = vlaneseq
      %v728 = vshrl.u32 %v727, 7
      %v729 = vsub.s32 1, %v728
      %v730 = vrot.slane %v721, %v729
      %v733 = vmul.f32 %v716, %v726
      %v734 = vmul.f32 %v718, %v730
      %v735 = vadd.f32 %v629, %v733
      %v736 = vadd.f32 %v630, %v734
      %737 = vrot.lane.b32.xlu0 %v414, 1
      %v738 = vpop.permute.xlu0 %737
      %739 = vrot.lane.b32.xlu0 %v416, 1
      %v740 = vpop.permute.xlu0 %739
      %741 = vrot.lane.b32.xlu0 %v415, 1
      %v742 = vpop.permute.xlu0 %741
      %743 = vrot.lane.b32.xlu0 %v417, 1
      %v744 = vpop.permute.xlu0 %743
      %vm745 = vcmp.lt.s32.totalorder %v427, 1
      %v746 = vsel %vm745, %v738, %v742
      %v747 = vsel %vm745, %v740, %v744
      %v748 = vsel %vm745, %v742, %v738
      %v749 = vsel %vm745, %v744, %v740
      %s750 = scalar_lea.vmem %s5, 12
      %v751 = vld [vmem:[%s750] sm:$0xf]
      %v753 = vsel %vm434, %v751, 0
      %755 = vmatprep.subr.mxu0 %v746
      %756 = vmatpush1.msra.mxu0 %v748
      %757 = vmatprep.subr.mxu0 %v747
      %758 = vmatpush1.msra.mxu0 %v749
      %759 = vmatprep.subr.mxu0 0.0
      %760 = vmatpush1.msra.mxu0 0.0
      %761 = vmatprep.subr.mxu0 0.0
      %762 = vmatpush1.msra.mxu0 0.0
      %763 = vmatprep.subr.mxu0 0.0
      %764 = vmatpush1.msra.mxu0 0.0
      %765 = vmatprep.subr.mxu0 0.0
      %766 = vmatpush1.msra.mxu0 0.0
      %767 = vmatprep.subr.mxu0 0.0
      %768 = vmatpush1.msra.mxu0 0.0
      %769 = vmatprep.subr.mxu0 0.0
      %770 = vmatpush1.msra.mxu0 0.0
      %771 = vmatprep.subr.mxu0 0.0
      %772 = vmatpush1.msra.mxu0 0.0
      %773 = vmatprep.subr.mxu0 0.0
      %774 = vmatpush1.msra.mxu0 0.0
      %775 = vmatprep.subr.mxu0 0.0
      %776 = vmatpush1.msra.mxu0 0.0
      %777 = vmatprep.subr.mxu0 0.0
      %778 = vmatpush1.msra.mxu0 0.0
      %779 = vmatprep.subr.mxu0 0.0
      %780 = vmatpush1.msra.mxu0 0.0
      %781 = vmatprep.subr.mxu0 0.0
      %782 = vmatpush1.msra.mxu0 0.0
      %783 = vmatprep.subr.mxu0 0.0
      %784 = vmatpush1.msra.mxu0 0.0
      %785 = vmatprep.subr.mxu0 0.0
      %786 = vmatpush1.msra.mxu0 0.0
      %787 = vmatprep.subr.mxu0 0.0
      %788 = vmatpush1.msra.mxu0 0.0
      %789 = vmatprep.subr.mxu0 0.0
      %790 = vmatpush1.msra.mxu0 0.0
      %791 = vmatprep.subr.mxu0 0.0
      %792 = vmatpush1.msra.mxu0 0.0
      %793 = vmatprep.subr.mxu0 0.0
      %794 = vmatpush1.msra.mxu0 0.0
      %795 = vmatprep.subr.mxu0 0.0
      %796 = vmatpush1.msra.mxu0 0.0
      %797 = vmatprep.subr.mxu0 0.0
      %798 = vmatpush1.msra.mxu0 0.0
      %799 = vmatprep.subr.mxu0 0.0
      %800 = vmatpush1.msra.mxu0 0.0
      %801 = vmatprep.subr.mxu0 0.0
      %802 = vmatpush1.msra.mxu0 0.0
      %803 = vmatprep.subr.mxu0 0.0
      %804 = vmatpush1.msra.mxu0 0.0
      %805 = vmatprep.subr.mxu0 0.0
      %806 = vmatpush1.msra.mxu0 0.0
      %807 = vmatprep.subr.mxu0 0.0
      %808 = vmatpush1.msra.mxu0 0.0
      %809 = vmatprep.subr.mxu0 0.0
      %810 = vmatpush1.msra.mxu0 0.0
      %811 = vmatprep.subr.mxu0 0.0
      %812 = vmatpush1.msra.mxu0 0.0
      %813 = vmatprep.subr.mxu0 0.0
      %814 = vmatpush1.msra.mxu0 0.0
      %815 = vmatprep.subr.mxu0 0.0
      %816 = vmatpush1.msra.mxu0 0.0
      %817 = vmatprep.subr.mxu0 0.0
      %818 = vmatpush1.msra.mxu0 0.0
      %819 = vmatprep.mubr.f32.mxu0 0.0
      %820 = vmatmul.mubr.f32.gmra.mrb[0].mxu0 %v753
      %v821 = vpop.f32.mrb[0].mxu0
      %v822 = vadd.f32 0.0, %v821
      %v823 = vpop.f32.mrb[0].mxu0
      %v824 = vadd.f32 0.0, %v823
      %825 = vdwg.mxu0
      %s826 = scalar_lea.vmem %s6, 3
      %v827 = vld [vmem:[%s826] ss:$8 sm:$0x3]
      %v829 = vlaneseq
      %v830 = vshrl.u32 %v829, 7
      %v831 = vsub.s32 0, %v830
      %v832 = vrot.slane %v827, %v831
      %v833 = vlaneseq
      %v834 = vshrl.u32 %v833, 7
      %v835 = vsub.s32 1, %v834
      %v836 = vrot.slane %v827, %v835
      %v839 = vmul.f32 %v822, %v832
      %v840 = vmul.f32 %v824, %v836
      %v841 = vadd.f32 %v735, %v839
      %v842 = vadd.f32 %v736, %v840
      %s843 = scalar_lea.vmem %s5, 16
      %v844 = vld [vmem:[%s843] sm:$0xf]
      %v846 = vsel %vm434, %v844, 0
      %848 = vmatprep.subr.mxu0 %v415
      %849 = vmatpush1.msra.mxu0 %v414
      %850 = vmatprep.subr.mxu0 %v417
      %851 = vmatpush1.msra.mxu0 %v416
      %852 = vmatprep.subr.mxu0 0.0
      %853 = vmatpush1.msra.mxu0 0.0
      %854 = vmatprep.subr.mxu0 0.0
      %855 = vmatpush1.msra.mxu0 0.0
      %856 = vmatprep.subr.mxu0 0.0
      %857 = vmatpush1.msra.mxu0 0.0
      %858 = vmatprep.subr.mxu0 0.0
      %859 = vmatpush1.msra.mxu0 0.0
      %860 = vmatprep.subr.mxu0 0.0
      %861 = vmatpush1.msra.mxu0 0.0
      %862 = vmatprep.subr.mxu0 0.0
      %863 = vmatpush1.msra.mxu0 0.0
      %864 = vmatprep.subr.mxu0 0.0
      %865 = vmatpush1.msra.mxu0 0.0
      %866 = vmatprep.subr.mxu0 0.0
      %867 = vmatpush1.msra.mxu0 0.0
      %868 = vmatprep.subr.mxu0 0.0
      %869 = vmatpush1.msra.mxu0 0.0
      %870 = vmatprep.subr.mxu0 0.0
      %871 = vmatpush1.msra.mxu0 0.0
      %872 = vmatprep.subr.mxu0 0.0
      %873 = vmatpush1.msra.mxu0 0.0
      %874 = vmatprep.subr.mxu0 0.0
      %875 = vmatpush1.msra.mxu0 0.0
      %876 = vmatprep.subr.mxu0 0.0
      %877 = vmatpush1.msra.mxu0 0.0
      %878 = vmatprep.subr.mxu0 0.0
      %879 = vmatpush1.msra.mxu0 0.0
      %880 = vmatprep.subr.mxu0 0.0
      %881 = vmatpush1.msra.mxu0 0.0
      %882 = vmatprep.subr.mxu0 0.0
      %883 = vmatpush1.msra.mxu0 0.0
      %884 = vmatprep.subr.mxu0 0.0
      %885 = vmatpush1.msra.mxu0 0.0
      %886 = vmatprep.subr.mxu0 0.0
      %887 = vmatpush1.msra.mxu0 0.0
      %888 = vmatprep.subr.mxu0 0.0
      %889 = vmatpush1.msra.mxu0 0.0
      %890 = vmatprep.subr.mxu0 0.0
      %891 = vmatpush1.msra.mxu0 0.0
      %892 = vmatprep.subr.mxu0 0.0
      %893 = vmatpush1.msra.mxu0 0.0
      %894 = vmatprep.subr.mxu0 0.0
      %895 = vmatpush1.msra.mxu0 0.0
      %896 = vmatprep.subr.mxu0 0.0
      %897 = vmatpush1.msra.mxu0 0.0
      %898 = vmatprep.subr.mxu0 0.0
      %899 = vmatpush1.msra.mxu0 0.0
      %900 = vmatprep.subr.mxu0 0.0
      %901 = vmatpush1.msra.mxu0 0.0
      %902 = vmatprep.subr.mxu0 0.0
      %903 = vmatpush1.msra.mxu0 0.0
      %904 = vmatprep.subr.mxu0 0.0
      %905 = vmatpush1.msra.mxu0 0.0
      %906 = vmatprep.subr.mxu0 0.0
      %907 = vmatpush1.msra.mxu0 0.0
      %908 = vmatprep.subr.mxu0 0.0
      %909 = vmatpush1.msra.mxu0 0.0
      %910 = vmatprep.subr.mxu0 0.0
      %911 = vmatpush1.msra.mxu0 0.0
      %912 = vmatprep.mubr.f32.mxu0 0.0
      %913 = vmatmul.mubr.f32.gmra.mrb[0].mxu0 %v846
      %v914 = vpop.f32.mrb[0].mxu0
      %v915 = vadd.f32 0.0, %v914
      %v916 = vpop.f32.mrb[0].mxu0
      %v917 = vadd.f32 0.0, %v916
      %918 = vdwg.mxu0
      %s919 = scalar_lea.vmem %s6, 4
      %v920 = vld [vmem:[%s919] ss:$8 sm:$0x3]
      %v922 = vlaneseq
      %v923 = vshrl.u32 %v922, 7
      %v924 = vsub.s32 0, %v923
      %v925 = vrot.slane %v920, %v924
      %v926 = vlaneseq
      %v927 = vshrl.u32 %v926, 7
      %v928 = vsub.s32 1, %v927
      %v929 = vrot.slane %v920, %v928
      %v932 = vmul.f32 %v915, %v925
      %v933 = vmul.f32 %v917, %v929
      %v934 = vadd.f32 %v841, %v932
      %v935 = vadd.f32 %v842, %v933
      %936 = vrot.lane.b32.xlu0 %v414, 127
      %v937 = vpop.permute.xlu0 %936
      %938 = vrot.lane.b32.xlu0 %v416, 127
      %v939 = vpop.permute.xlu0 %938
      %940 = vrot.lane.b32.xlu0 %v415, 127
      %v941 = vpop.permute.xlu0 %940
      %942 = vrot.lane.b32.xlu0 %v417, 127
      %v943 = vpop.permute.xlu0 %942
      %vm944 = vcmp.lt.s32.totalorder %v427, 127
      %v945 = vsel %vm944, %v937, %v941
      %v946 = vsel %vm944, %v939, %v943
      %v947 = vsel %vm944, %v941, %v937
      %v948 = vsel %vm944, %v943, %v939
      %s949 = scalar_lea.vmem %s5, 20
      %v950 = vld [vmem:[%s949] sm:$0xf]
      %v952 = vsel %vm434, %v950, 0
      %954 = vmatprep.subr.mxu0 %v947
      %955 = vmatpush1.msra.mxu0 %v945
      %956 = vmatprep.subr.mxu0 %v948
      %957 = vmatpush1.msra.mxu0 %v946
      %958 = vmatprep.subr.mxu0 0.0
      %959 = vmatpush1.msra.mxu0 0.0
      %960 = vmatprep.subr.mxu0 0.0
      %961 = vmatpush1.msra.mxu0 0.0
      %962 = vmatprep.subr.mxu0 0.0
      %963 = vmatpush1.msra.mxu0 0.0
      %964 = vmatprep.subr.mxu0 0.0
      %965 = vmatpush1.msra.mxu0 0.0
      %966 = vmatprep.subr.mxu0 0.0
      %967 = vmatpush1.msra.mxu0 0.0
      %968 = vmatprep.subr.mxu0 0.0
      %969 = vmatpush1.msra.mxu0 0.0
      %970 = vmatprep.subr.mxu0 0.0
      %971 = vmatpush1.msra.mxu0 0.0
      %972 = vmatprep.subr.mxu0 0.0
      %973 = vmatpush1.msra.mxu0 0.0
      %974 = vmatprep.subr.mxu0 0.0
      %975 = vmatpush1.msra.mxu0 0.0
      %976 = vmatprep.subr.mxu0 0.0
      %977 = vmatpush1.msra.mxu0 0.0
      %978 = vmatprep.subr.mxu0 0.0
      %979 = vmatpush1.msra.mxu0 0.0
      %980 = vmatprep.subr.mxu0 0.0
      %981 = vmatpush1.msra.mxu0 0.0
      %982 = vmatprep.subr.mxu0 0.0
      %983 = vmatpush1.msra.mxu0 0.0
      %984 = vmatprep.subr.mxu0 0.0
      %985 = vmatpush1.msra.mxu0 0.0
      %986 = vmatprep.subr.mxu0 0.0
      %987 = vmatpush1.msra.mxu0 0.0
      %988 = vmatprep.subr.mxu0 0.0
      %989 = vmatpush1.msra.mxu0 0.0
      %990 = vmatprep.subr.mxu0 0.0
      %991 = vmatpush1.msra.mxu0 0.0
      %992 = vmatprep.subr.mxu0 0.0
      %993 = vmatpush1.msra.mxu0 0.0
      %994 = vmatprep.subr.mxu0 0.0
      %995 = vmatpush1.msra.mxu0 0.0
      %996 = vmatprep.subr.mxu0 0.0
      %997 = vmatpush1.msra.mxu0 0.0
      %998 = vmatprep.subr.mxu0 0.0
      %999 = vmatpush1.msra.mxu0 0.0
      %1000 = vmatprep.subr.mxu0 0.0
      %1001 = vmatpush1.msra.mxu0 0.0
      %1002 = vmatprep.subr.mxu0 0.0
      %1003 = vmatpush1.msra.mxu0 0.0
      %1004 = vmatprep.subr.mxu0 0.0
      %1005 = vmatpush1.msra.mxu0 0.0
      %1006 = vmatprep.subr.mxu0 0.0
      %1007 = vmatpush1.msra.mxu0 0.0
      %1008 = vmatprep.subr.mxu0 0.0
      %1009 = vmatpush1.msra.mxu0 0.0
      %1010 = vmatprep.subr.mxu0 0.0
      %1011 = vmatpush1.msra.mxu0 0.0
      %1012 = vmatprep.subr.mxu0 0.0
      %1013 = vmatpush1.msra.mxu0 0.0
      %1014 = vmatprep.subr.mxu0 0.0
      %1015 = vmatpush1.msra.mxu0 0.0
      %1016 = vmatprep.subr.mxu0 0.0
      %1017 = vmatpush1.msra.mxu0 0.0
      %1018 = vmatprep.mubr.f32.mxu0 0.0
      %1019 = vmatmul.mubr.f32.gmra.mrb[0].mxu0 %v952
      %v1020 = vpop.f32.mrb[0].mxu0
      %v1021 = vadd.f32 0.0, %v1020
      %v1022 = vpop.f32.mrb[0].mxu0
      %v1023 = vadd.f32 0.0, %v1022
      %1024 = vdwg.mxu0
      %s1025 = scalar_lea.vmem %s6, 5
      %v1026 = vld [vmem:[%s1025] ss:$8 sm:$0x3]
      %v1028 = vlaneseq
      %v1029 = vshrl.u32 %v1028, 7
      %v1030 = vsub.s32 0, %v1029
      %v1031 = vrot.slane %v1026, %v1030
      %v1032 = vlaneseq
      %v1033 = vshrl.u32 %v1032, 7
      %v1034 = vsub.s32 1, %v1033
      %v1035 = vrot.slane %v1026, %v1034
      %v1038 = vmul.f32 %v1021, %v1031
      %v1039 = vmul.f32 %v1023, %v1035
      %v1040 = vadd.f32 %v934, %v1038
      %v1041 = vadd.f32 %v935, %v1039
      %1042 = vrot.lane.b32.xlu0 %v414, 113
      %v1043 = vpop.permute.xlu0 %1042
      %1044 = vrot.lane.b32.xlu0 %v416, 113
      %v1045 = vpop.permute.xlu0 %1044
      %1046 = vrot.lane.b32.xlu0 %v415, 113
      %v1047 = vpop.permute.xlu0 %1046
      %1048 = vrot.lane.b32.xlu0 %v417, 113
      %v1049 = vpop.permute.xlu0 %1048
      %vm1050 = vcmp.lt.s32.totalorder %v427, 113
      %v1051 = vsel %vm1050, %v1043, %v1047
      %v1052 = vsel %vm1050, %v1045, %v1049
      %v1053 = vsel %vm1050, %v1047, %v1043
      %v1054 = vsel %vm1050, %v1049, %v1045
      %s1055 = scalar_lea.vmem %s5, 24
      %v1056 = vld [vmem:[%s1055] sm:$0xf]
      %v1058 = vsel %vm434, %v1056, 0
      %1060 = vmatprep.subr.mxu0 %v1053
      %1061 = vmatpush1.msra.mxu0 %v1051
      %1062 = vmatprep.subr.mxu0 %v1054
      %1063 = vmatpush1.msra.mxu0 %v1052
      %1064 = vmatprep.subr.mxu0 0.0
      %1065 = vmatpush1.msra.mxu0 0.0
      %1066 = vmatprep.subr.mxu0 0.0
      %1067 = vmatpush1.msra.mxu0 0.0
      %1068 = vmatprep.subr.mxu0 0.0
      %1069 = vmatpush1.msra.mxu0 0.0
      %1070 = vmatprep.subr.mxu0 0.0
      %1071 = vmatpush1.msra.mxu0 0.0
      %1072 = vmatprep.subr.mxu0 0.0
      %1073 = vmatpush1.msra.mxu0 0.0
      %1074 = vmatprep.subr.mxu0 0.0
      %1075 = vmatpush1.msra.mxu0 0.0
      %1076 = vmatprep.subr.mxu0 0.0
      %1077 = vmatpush1.msra.mxu0 0.0
      %1078 = vmatprep.subr.mxu0 0.0
      %1079 = vmatpush1.msra.mxu0 0.0
      %1080 = vmatprep.subr.mxu0 0.0
      %1081 = vmatpush1.msra.mxu0 0.0
      %1082 = vmatprep.subr.mxu0 0.0
      %1083 = vmatpush1.msra.mxu0 0.0
      %1084 = vmatprep.subr.mxu0 0.0
      %1085 = vmatpush1.msra.mxu0 0.0
      %1086 = vmatprep.subr.mxu0 0.0
      %1087 = vmatpush1.msra.mxu0 0.0
      %1088 = vmatprep.subr.mxu0 0.0
      %1089 = vmatpush1.msra.mxu0 0.0
      %1090 = vmatprep.subr.mxu0 0.0
      %1091 = vmatpush1.msra.mxu0 0.0
      %1092 = vmatprep.subr.mxu0 0.0
      %1093 = vmatpush1.msra.mxu0 0.0
      %1094 = vmatprep.subr.mxu0 0.0
      %1095 = vmatpush1.msra.mxu0 0.0
      %1096 = vmatprep.subr.mxu0 0.0
      %1097 = vmatpush1.msra.mxu0 0.0
      %1098 = vmatprep.subr.mxu0 0.0
      %1099 = vmatpush1.msra.mxu0 0.0
      %1100 = vmatprep.subr.mxu0 0.0
      %1101 = vmatpush1.msra.mxu0 0.0
      %1102 = vmatprep.subr.mxu0 0.0
      %1103 = vmatpush1.msra.mxu0 0.0
      %1104 = vmatprep.subr.mxu0 0.0
      %1105 = vmatpush1.msra.mxu0 0.0
      %1106 = vmatprep.subr.mxu0 0.0
      %1107 = vmatpush1.msra.mxu0 0.0
      %1108 = vmatprep.subr.mxu0 0.0
      %1109 = vmatpush1.msra.mxu0 0.0
      %1110 = vmatprep.subr.mxu0 0.0
      %1111 = vmatpush1.msra.mxu0 0.0
      %1112 = vmatprep.subr.mxu0 0.0
      %1113 = vmatpush1.msra.mxu0 0.0
      %1114 = vmatprep.subr.mxu0 0.0
      %1115 = vmatpush1.msra.mxu0 0.0
      %1116 = vmatprep.subr.mxu0 0.0
      %1117 = vmatpush1.msra.mxu0 0.0
      %1118 = vmatprep.subr.mxu0 0.0
      %1119 = vmatpush1.msra.mxu0 0.0
      %1120 = vmatprep.subr.mxu0 0.0
      %1121 = vmatpush1.msra.mxu0 0.0
      %1122 = vmatprep.subr.mxu0 0.0
      %1123 = vmatpush1.msra.mxu0 0.0
      %1124 = vmatprep.mubr.f32.mxu0 0.0
      %1125 = vmatmul.mubr.f32.gmra.mrb[0].mxu0 %v1058
      %v1126 = vpop.f32.mrb[0].mxu0
      %v1127 = vadd.f32 0.0, %v1126
      %v1128 = vpop.f32.mrb[0].mxu0
      %v1129 = vadd.f32 0.0, %v1128
      %1130 = vdwg.mxu0
      %s1131 = scalar_lea.vmem %s6, 6
      %v1132 = vld [vmem:[%s1131] ss:$8 sm:$0x3]
      %v1134 = vlaneseq
      %v1135 = vshrl.u32 %v1134, 7
      %v1136 = vsub.s32 0, %v1135
      %v1137 = vrot.slane %v1132, %v1136
      %v1138 = vlaneseq
      %v1139 = vshrl.u32 %v1138, 7
      %v1140 = vsub.s32 1, %v1139
      %v1141 = vrot.slane %v1132, %v1140
      %v1144 = vmul.f32 %v1127, %v1137
      %v1145 = vmul.f32 %v1129, %v1141
      %v1146 = vadd.f32 %v1040, %v1144
      %v1147 = vadd.f32 %v1041, %v1145
      %1148 = vrot.lane.b32.xlu0 %v414, 112
      %v1149 = vpop.permute.xlu0 %1148
      %1150 = vrot.lane.b32.xlu0 %v416, 112
      %v1151 = vpop.permute.xlu0 %1150
      %1152 = vrot.lane.b32.xlu0 %v415, 112
      %v1153 = vpop.permute.xlu0 %1152
      %1154 = vrot.lane.b32.xlu0 %v417, 112
      %v1155 = vpop.permute.xlu0 %1154
      %vm1156 = vcmp.lt.s32.totalorder %v427, 112
      %v1157 = vsel %vm1156, %v1149, %v1153
      %v1158 = vsel %vm1156, %v1151, %v1155
      %v1159 = vsel %vm1156, %v1153, %v1149
      %v1160 = vsel %vm1156, %v1155, %v1151
      %s1161 = scalar_lea.vmem %s5, 28
      %v1162 = vld [vmem:[%s1161] sm:$0xf]
      %v1164 = vsel %vm434, %v1162, 0
      %1166 = vmatprep.subr.mxu0 %v1159
      %1167 = vmatpush1.msra.mxu0 %v1157
      %1168 = vmatprep.subr.mxu0 %v1160
      %1169 = vmatpush1.msra.mxu0 %v1158
      %1170 = vmatprep.subr.mxu0 0.0
      %1171 = vmatpush1.msra.mxu0 0.0
      %1172 = vmatprep.subr.mxu0 0.0
      %1173 = vmatpush1.msra.mxu0 0.0
      %1174 = vmatprep.subr.mxu0 0.0
      %1175 = vmatpush1.msra.mxu0 0.0
      %1176 = vmatprep.subr.mxu0 0.0
      %1177 = vmatpush1.msra.mxu0 0.0
      %1178 = vmatprep.subr.mxu0 0.0
      %1179 = vmatpush1.msra.mxu0 0.0
      %1180 = vmatprep.subr.mxu0 0.0
      %1181 = vmatpush1.msra.mxu0 0.0
      %1182 = vmatprep.subr.mxu0 0.0
      %1183 = vmatpush1.msra.mxu0 0.0
      %1184 = vmatprep.subr.mxu0 0.0
      %1185 = vmatpush1.msra.mxu0 0.0
      %1186 = vmatprep.subr.mxu0 0.0
      %1187 = vmatpush1.msra.mxu0 0.0
      %1188 = vmatprep.subr.mxu0 0.0
      %1189 = vmatpush1.msra.mxu0 0.0
      %1190 = vmatprep.subr.mxu0 0.0
      %1191 = vmatpush1.msra.mxu0 0.0
      %1192 = vmatprep.subr.mxu0 0.0
      %1193 = vmatpush1.msra.mxu0 0.0
      %1194 = vmatprep.subr.mxu0 0.0
      %1195 = vmatpush1.msra.mxu0 0.0
      %1196 = vmatprep.subr.mxu0 0.0
      %1197 = vmatpush1.msra.mxu0 0.0
      %1198 = vmatprep.subr.mxu0 0.0
      %1199 = vmatpush1.msra.mxu0 0.0
      %1200 = vmatprep.subr.mxu0 0.0
      %1201 = vmatpush1.msra.mxu0 0.0
      %1202 = vmatprep.subr.mxu0 0.0
      %1203 = vmatpush1.msra.mxu0 0.0
      %1204 = vmatprep.subr.mxu0 0.0
      %1205 = vmatpush1.msra.mxu0 0.0
      %1206 = vmatprep.subr.mxu0 0.0
      %1207 = vmatpush1.msra.mxu0 0.0
      %1208 = vmatprep.subr.mxu0 0.0
      %1209 = vmatpush1.msra.mxu0 0.0
      %1210 = vmatprep.subr.mxu0 0.0
      %1211 = vmatpush1.msra.mxu0 0.0
      %1212 = vmatprep.subr.mxu0 0.0
      %1213 = vmatpush1.msra.mxu0 0.0
      %1214 = vmatprep.subr.mxu0 0.0
      %1215 = vmatpush1.msra.mxu0 0.0
      %1216 = vmatprep.subr.mxu0 0.0
      %1217 = vmatpush1.msra.mxu0 0.0
      %1218 = vmatprep.subr.mxu0 0.0
      %1219 = vmatpush1.msra.mxu0 0.0
      %1220 = vmatprep.subr.mxu0 0.0
      %1221 = vmatpush1.msra.mxu0 0.0
      %1222 = vmatprep.subr.mxu0 0.0
      %1223 = vmatpush1.msra.mxu0 0.0
      %1224 = vmatprep.subr.mxu0 0.0
      %1225 = vmatpush1.msra.mxu0 0.0
      %1226 = vmatprep.subr.mxu0 0.0
      %1227 = vmatpush1.msra.mxu0 0.0
      %1228 = vmatprep.subr.mxu0 0.0
      %1229 = vmatpush1.msra.mxu0 0.0
      %1230 = vmatprep.mubr.f32.mxu0 0.0
      %1231 = vmatmul.mubr.f32.gmra.mrb[0].mxu0 %v1164
      %v1232 = vpop.f32.mrb[0].mxu0
      %v1233 = vadd.f32 0.0, %v1232
      %v1234 = vpop.f32.mrb[0].mxu0
      %v1235 = vadd.f32 0.0, %v1234
      %1236 = vdwg.mxu0
      %s1237 = scalar_lea.vmem %s6, 7
      %v1238 = vld [vmem:[%s1237] ss:$8 sm:$0x3]
      %v1240 = vlaneseq
      %v1241 = vshrl.u32 %v1240, 7
      %v1242 = vsub.s32 0, %v1241
      %v1243 = vrot.slane %v1238, %v1242
      %v1244 = vlaneseq
      %v1245 = vshrl.u32 %v1244, 7
      %v1246 = vsub.s32 1, %v1245
      %v1247 = vrot.slane %v1238, %v1246
      %v1250 = vmul.f32 %v1233, %v1243
      %v1251 = vmul.f32 %v1235, %v1247
      %v1252 = vadd.f32 %v1146, %v1250
      %v1253 = vadd.f32 %v1147, %v1251
      %1254 = vrot.lane.b32.xlu0 %v414, 111
      %v1255 = vpop.permute.xlu0 %1254
      %1256 = vrot.lane.b32.xlu0 %v416, 111
      %v1257 = vpop.permute.xlu0 %1256
      %1258 = vrot.lane.b32.xlu0 %v415, 111
      %v1259 = vpop.permute.xlu0 %1258
      %1260 = vrot.lane.b32.xlu0 %v417, 111
      %v1261 = vpop.permute.xlu0 %1260
      %vm1262 = vcmp.lt.s32.totalorder %v427, 111
      %v1263 = vsel %vm1262, %v1255, %v1259
      %v1264 = vsel %vm1262, %v1257, %v1261
      %v1265 = vsel %vm1262, %v1259, %v1255
      %v1266 = vsel %vm1262, %v1261, %v1257
      %s1267 = scalar_lea.vmem %s5, 32
      %v1268 = vld [vmem:[%s1267] sm:$0xf]
      %v1270 = vsel %vm434, %v1268, 0
      %1272 = vmatprep.subr.mxu0 %v1265
      %1273 = vmatpush1.msra.mxu0 %v1263
      %1274 = vmatprep.subr.mxu0 %v1266
      %1275 = vmatpush1.msra.mxu0 %v1264
      %1276 = vmatprep.subr.mxu0 0.0
      %1277 = vmatpush1.msra.mxu0 0.0
      %1278 = vmatprep.subr.mxu0 0.0
      %1279 = vmatpush1.msra.mxu0 0.0
      %1280 = vmatprep.subr.mxu0 0.0
      %1281 = vmatpush1.msra.mxu0 0.0
      %1282 = vmatprep.subr.mxu0 0.0
      %1283 = vmatpush1.msra.mxu0 0.0
      %1284 = vmatprep.subr.mxu0 0.0
      %1285 = vmatpush1.msra.mxu0 0.0
      %1286 = vmatprep.subr.mxu0 0.0
      %1287 = vmatpush1.msra.mxu0 0.0
      %1288 = vmatprep.subr.mxu0 0.0
      %1289 = vmatpush1.msra.mxu0 0.0
      %1290 = vmatprep.subr.mxu0 0.0
      %1291 = vmatpush1.msra.mxu0 0.0
      %1292 = vmatprep.subr.mxu0 0.0
      %1293 = vmatpush1.msra.mxu0 0.0
      %1294 = vmatprep.subr.mxu0 0.0
      %1295 = vmatpush1.msra.mxu0 0.0
      %1296 = vmatprep.subr.mxu0 0.0
      %1297 = vmatpush1.msra.mxu0 0.0
      %1298 = vmatprep.subr.mxu0 0.0
      %1299 = vmatpush1.msra.mxu0 0.0
      %1300 = vmatprep.subr.mxu0 0.0
      %1301 = vmatpush1.msra.mxu0 0.0
      %1302 = vmatprep.subr.mxu0 0.0
      %1303 = vmatpush1.msra.mxu0 0.0
      %1304 = vmatprep.subr.mxu0 0.0
      %1305 = vmatpush1.msra.mxu0 0.0
      %1306 = vmatprep.subr.mxu0 0.0
      %1307 = vmatpush1.msra.mxu0 0.0
      %1308 = vmatprep.subr.mxu0 0.0
      %1309 = vmatpush1.msra.mxu0 0.0
      %1310 = vmatprep.subr.mxu0 0.0
      %1311 = vmatpush1.msra.mxu0 0.0
      %1312 = vmatprep.subr.mxu0 0.0
      %1313 = vmatpush1.msra.mxu0 0.0
      %1314 = vmatprep.subr.mxu0 0.0
      %1315 = vmatpush1.msra.mxu0 0.0
      %1316 = vmatprep.subr.mxu0 0.0
      %1317 = vmatpush1.msra.mxu0 0.0
      %1318 = vmatprep.subr.mxu0 0.0
      %1319 = vmatpush1.msra.mxu0 0.0
      %1320 = vmatprep.subr.mxu0 0.0
      %1321 = vmatpush1.msra.mxu0 0.0
      %1322 = vmatprep.subr.mxu0 0.0
      %1323 = vmatpush1.msra.mxu0 0.0
      %1324 = vmatprep.subr.mxu0 0.0
      %1325 = vmatpush1.msra.mxu0 0.0
      %1326 = vmatprep.subr.mxu0 0.0
      %1327 = vmatpush1.msra.mxu0 0.0
      %1328 = vmatprep.subr.mxu0 0.0
      %1329 = vmatpush1.msra.mxu0 0.0
      %1330 = vmatprep.subr.mxu0 0.0
      %1331 = vmatpush1.msra.mxu0 0.0
      %1332 = vmatprep.subr.mxu0 0.0
      %1333 = vmatpush1.msra.mxu0 0.0
      %1334 = vmatprep.subr.mxu0 0.0
      %1335 = vmatpush1.msra.mxu0 0.0
      %1336 = vmatprep.mubr.f32.mxu0 0.0
      %1337 = vmatmul.mubr.f32.gmra.mrb[0].mxu0 %v1270
      %v1338 = vpop.f32.mrb[0].mxu0
      %v1339 = vadd.f32 0.0, %v1338
      %v1340 = vpop.f32.mrb[0].mxu0
      %v1341 = vadd.f32 0.0, %v1340
      %1342 = vdwg.mxu0
      %s1343 = scalar_lea.vmem %s6, 16
      %v1344 = vld [vmem:[%s1343] ss:$8 sm:$0x3]
      %v1346 = vlaneseq
      %v1347 = vshrl.u32 %v1346, 7
      %v1348 = vsub.s32 0, %v1347
      %v1349 = vrot.slane %v1344, %v1348
      %v1350 = vlaneseq
      %v1351 = vshrl.u32 %v1350, 7
      %v1352 = vsub.s32 1, %v1351
      %v1353 = vrot.slane %v1344, %v1352
      %v1356 = vmul.f32 %v1339, %v1349
      %v1357 = vmul.f32 %v1341, %v1353
      %v1358 = vadd.f32 %v1252, %v1356
      %v1359 = vadd.f32 %v1253, %v1357
      %v1361 = vcombine.high %v279, %v279
      %1363 = vst [vmem:[%s278] sm:$0xf] %v279
      %1364 = vst [vmem:[%s278 + $0x8] sm:$0xf] %v1361
      %v1367 = vrot.slane %v1358, 4
      %v1368 = vrot.slane %v1359, 4
      %1371 = vst [vmem:[%s278] sm:$0xf0] %v1367
      %1372 = vst [vmem:[%s278 + $0x8] sm:$0xf0] %v1368
      %p1373 = scmp.lt.s32.totalorder %s18, 1
      %s1374 = scalar_select %p1373, %s18, 1
      %s1375 = smul.addr %s1374, 2
      %s1376 = smul.addr %s1375, 8
      %s1377 = scalar_lea.vmem %s7, %s1376
      // Predicated region
      $region49: #{xdense_unit_forward.1} parent=47 // pred_check
        %p1378 = pneg %p188
      $region50: #{xdense_unit_forward.1} parent=47 // pred_check_branch
        %1380 = sbr.rel (%p1378) target = $region52
      $region51: #{xdense_unit_forward.1} parent=47 // pred_region
        _
      $region52: #{xdense_unit_forward.1} parent=47 // pred_fallthru
        _
    $region48: #{xdense_unit_forward.1} parent=5 // pred_fallthru
      _
    %p1381 = scmp.le.s32.totalorder 2, %s13
    // Predicated region
    $region53: #{xdense_unit_forward.1} parent=5 // pred_check
      %p1382 = pneg %p1381
    $region54: #{xdense_unit_forward.1} parent=5 // pred_check_branch
      %1384 = sbr.rel (%p1382) target = $region56
    $region55: #{xdense_unit_forward.1} parent=5 // pred_region
      %s1385 = ssub.s32 %s13, 2
      // Predicated region
      $region57: #{xdense_unit_forward.1} parent=55 // pred_check
        %p1386 = pneg %p194
      $region58: #{xdense_unit_forward.1} parent=55 // pred_check_branch
        %1388 = sbr.rel (%p1386) target = $region60
      $region59: #{xdense_unit_forward.1} parent=55 // pred_region
        %p1389 = scmp.lt.s32.totalorder %s19, 1
        %s1390 = scalar_select %p1389, %s19, 1
        %s1391 = smul.addr %s1390, 2
        %s1392 = smul.addr %s1391, 8
        %s1393 = scalar_lea.vmem %s7, %s1392
      $region60: #{xdense_unit_forward.1} parent=55 // pred_fallthru
        _
    $region56: #{xdense_unit_forward.1} parent=5 // pred_fallthru
      _
  $region6: #{xdense_unit_forward.1} parent=0 // loop_footer
    %s17 = sadd.s32 1, %s13
  $region7: #{xdense_unit_forward.1} parent=0 // loop_footer_branch
    %12 = sbr.rel target = $region3
  $region8: #{xdense_unit_forward.1} parent=0 // loop_exit
    _

</llo_original>
